<compile_context>
chip_gen: v7x
topology: tpu7x:2x2x1
jax: 0.10.0
libtpu: 0.0.40
codegen_flags: <defaults>
</compile_context>

<pallas_src>
import math

import jax
import jax.numpy as jnp
import numpy as np
from jax import lax
from jax.experimental import pallas as pl
from jax.experimental.pallas import tpu as pltpu


# ----------------------------------------------------------------------------
# Parameter setup (glue, plain JAX): Cayley orthogonalisation.
# TODO(synk): cayley uses a dense matrix inverse (parameter-only, O(Z^3) once);
# it has no clean Pallas equivalent and is kept outside the kernel.
# ----------------------------------------------------------------------------
def cayley(W):
    cout, cin = W.shape
    if cin > cout:
        return cayley(W.T).T
    U, V = W[:cin, :], W[cin:, :]
    I = jnp.eye(cin, dtype=W.dtype)
    A = U - U.T + V.T @ V
    iIpA = jnp.linalg.inv(I + A)
    return jnp.concatenate((iIpA @ (I - A), -2.0 * V @ iIpA), axis=0)


def xavier_normal(key, shape):
    fan_out, fan_in = shape
    std = math.sqrt(2.0 / (fan_in + fan_out))
    return std * jax.random.normal(key, shape, jnp.float32)


def _round_up(x, m):
    return ((x + m - 1) // m) * m


# ----------------------------------------------------------------------------
# In-kernel helpers.  All matmuls accumulate in f32 on the MXU.
# ----------------------------------------------------------------------------
def _mm(a, b):        # a @ b
    return lax.dot_general(a, b, (((1,), (0,)), ((), ())),
                           preferred_element_type=jnp.float32)


def _mm_ta(a, b):     # a.T @ b   (contract dim 0 with dim 0)
    return lax.dot_general(a, b, (((0,), (0,)), ((), ())),
                           preferred_element_type=jnp.float32)


def _mm_tb(a, b):     # a @ b.T   (contract dim 1 with dim 1)
    return lax.dot_general(a, b, (((1,), (1,)), ((), ())),
                           preferred_element_type=jnp.float32)


def _rehu(x):
    # ReHU(d=1): 0 for x<=0, x^2/2 for 0<x<1, x-0.5 for x>=1 (clip/square form).
    c = jnp.clip(x, 0.0, 1.0)
    return 0.5 * c * c + jnp.maximum(x - 1.0, 0.0)


def make_monlip_kernel(units, mu, nu, tb, sub, compute_dtype):
    K = len(units)
    assert tb % sub == 0
    n_sub = tb // sub
    sqrt_gam = math.sqrt(nu - mu)
    sqrt_2 = math.sqrt(2.0)

    offsets, off = [], 0
    for nz in units:
        offsets.append(off)
        off += nz

    def kernel(*refs):
        x_ref, q_ref, by_ref = refs[0], refs[1], refs[2]
        r_refs = refs[3:3 + K]                 # R_k          (nz, nz + nz_prev)
        b_refs = refs[3 + K:3 + 2 * K]         # biases       (nz, 1), f32
        y_ref = refs[3 + 2 * K]

        # Parameters are tiny; load once per grid step (pre-cast in the wrapper).
        Qc = q_ref[...]                        # (Z, F)  compute dtype
        by = by_ref[...]                       # (1, F)  f32
        Rc = [r[...] for r in r_refs]
        bc = [b[...] for b in b_refs]

        # Strip-mine the batch (lane) axis: big HBM tile, bounded vreg live set.
        def sub_body(s, carry):
            o = pl.multiple_of(s * sub, sub)
            xb = x_ref[pl.ds(o, sub), :]                       # (sub, F), io dtype
            xb_c = xb.astype(compute_dtype)

            # xh^T = sqrt(gam) * Q @ x^T  -> lane-dense (Z, sub), batch on lanes.
            xh = sqrt_gam * _mm_tb(Qc, xb_c)                   # (Z, sub) f32

            parts = []
            hk_1 = None                                        # (nz_prev, sub) f32
            for k, nz in enumerate(units):
                xk = xh[offsets[k]:offsets[k] + nz, :]         # 8/16-aligned sublane slice
                inp = xk if k == 0 else jnp.concatenate((xk, hk_1), axis=0)
                pre = sqrt_2 * _mm(Rc[k], inp.astype(compute_dtype)) + bc[k]
                g = _rehu(pre)                                 # f32 elementwise (v5e-safe)
                gh = sqrt_2 * _mm_ta(Rc[k], g.astype(compute_dtype))   # (nz+nz_prev, sub)
                hk = gh[:nz, :] - xk
                if k > 0:
                    parts.append(hk_1 - gh[nz:, :])
                hk_1 = hk
            parts.append(hk_1)
            yh = parts[0] if len(parts) == 1 else jnp.concatenate(parts, axis=0)  # (Z, sub)

            # Single back-projection; trans_a matmul emits the (sub, F) output layout.
            proj = _mm_ta(yh.astype(compute_dtype), Qc)        # (sub, F) f32
            y = 0.5 * ((mu + nu) * xb.astype(jnp.float32) + sqrt_gam * proj) + by
            y_ref[pl.ds(o, sub), :] = y.astype(y_ref.dtype)
            return carry

        lax.fori_loop(0, n_sub, sub_body, 0)

    return kernel


# ----------------------------------------------------------------------------
# Wrapper: natural (B, F) layout in HBM, contiguous row-block grid, pallas_call.
# ----------------------------------------------------------------------------
def monlip_forward(x, Q, by, Rs, bs, units, mu, nu, *, tb=1024, sub=256,
                   io_dtype=None, compute_dtype=jnp.float32):
    B, F = x.shape
    Z = sum(units)
    K = len(units)
    io_dtype = x.dtype if io_dtype is None else io_dtype

    # Keep >= 2 "parallel" grid tiles when the batch allows it (v7x: 2 TCs),
    # and keep tb a multiple of the in-kernel strip-mine width `sub`.
    tb = max(sub, min(_round_up(tb, sub), _round_up(pl.cdiv(B, 2), sub)))
    B_pad = _round_up(B, tb)

    x_io = x.astype(io_dtype)
    if B_pad != B:
        # TODO(synk): a ragged last tile would avoid this extra HBM copy.
        x_io = jnp.pad(x_io, ((0, B_pad - B), (0, 0)))

    # Pre-cast MXU operands once in the wrapper; biases stay f32 (VPU adds).
    Qc = Q.astype(compute_dtype)
    Rc = [R.astype(compute_dtype) for R in Rs]
    bs_c = [jnp.reshape(b, (-1, 1)).astype(jnp.float32) for b in bs]
    by_r = jnp.reshape(by, (1, -1)).astype(jnp.float32)

    kernel = make_monlip_kernel(units, mu, nu, tb, sub, compute_dtype)

    in_specs = [
        pl.BlockSpec((tb, F), lambda i: (i, 0)),      # x: contiguous row block
        pl.BlockSpec(Qc.shape, lambda i: (0, 0)),     # Q: whole
        pl.BlockSpec(by_r.shape, lambda i: (0, 0)),   # by: (1, F)
    ]
    in_specs += [pl.BlockSpec(R.shape, lambda i: (0, 0)) for R in Rc]
    in_specs += [pl.BlockSpec(b.shape, lambda i: (0, 0)) for b in bs_c]

    # Advisory scheduler hint.
    flops = 4 * B_pad * Z * F                          # xh + back-projection
    nz_prev = 0
    for nz in units:
        flops += 4 * B_pad * nz * (nz + nz_prev)       # pre + gh per unit
        nz_prev = nz
    param_bytes = (int(Qc.size) * Qc.dtype.itemsize + int(by_r.size) * 4
                   + sum(int(R.size) * R.dtype.itemsize for R in Rc)
                   + sum(int(b.size) * 4 for b in bs_c))
    io_bytes = B_pad * F * 2 * np.dtype(io_dtype).itemsize
    bytes_accessed = io_bytes + param_bytes

    y = pl.pallas_call(
        kernel,
        out_shape=jax.ShapeDtypeStruct((B_pad, F), io_dtype),
        grid=(B_pad // tb,),
        in_specs=in_specs,
        out_specs=pl.BlockSpec((tb, F), lambda i: (i, 0)),
        compiler_params=pltpu.CompilerParams(
            dimension_semantics=("parallel",)),
        cost_estimate=pl.CostEstimate(flops=int(flops), transcendentals=0,
                                      bytes_accessed=int(bytes_accessed)),
    )(x_io, Qc, by_r, *Rc, *bs_c)

    return y[:B] if B_pad != B else y


# ----------------------------------------------------------------------------
# Pure-JAX reference (mirrors the PyTorch forward) for validation.
# ----------------------------------------------------------------------------
def monlip_reference(x, Q, by, Rs, bs, units, mu, nu):
    sqrt_gam = math.sqrt(nu - mu)
    sqrt_2 = math.sqrt(2.0)
    xh = sqrt_gam * x @ Q.T
    yh = []
    hk_1 = xh[..., :0]
    idx = 0
    for k, nz in enumerate(units):
        xk = xh[..., idx:idx + nz]
        gh = sqrt_2 * _rehu(sqrt_2 * jnp.concatenate((xk, hk_1), axis=-1)
                            @ Rs[k].T + bs[k]) @ Rs[k]
        hk = gh[..., :nz] - xk
        gk = gh[..., nz:]
        yh.append(hk_1 - gk)
        idx += nz
        hk_1 = hk
    yh.append(hk_1)
    yh = jnp.concatenate(yh, axis=-1)
    return 0.5 * ((mu + nu) * x + sqrt_gam * yh @ Q) + by


# ----------------------------------------------------------------------------
if __name__ == "__main__":
    key = jax.random.PRNGKey(0)
    B, F = 1024, 32                     # 2 "parallel" grid tiles (tb capped to 512)
    units = (16, 16)                    # unit_features; sum(units) = Z = 32
    mu, nu = 0.1, 10.0
    Z = sum(units)

    k_fq, k_x, *k_fr = jax.random.split(key, 2 + len(units))

    # --- deterministic parameter init (mirrors the module's __init__) -------
    Fq = xavier_normal(k_fq, (Z, F))
    fq = jnp.linalg.norm(Fq)            # init constant to ||Fq||
    by = jnp.zeros((F,), jnp.float32)

    Frs, frs, bs = [], [], []
    nz_1 = 0
    for kk, nz in enumerate(units):
        R = xavier_normal(k_fr[kk], (nz, nz + nz_1))
        Frs.append(R)
        frs.append(jnp.linalg.norm(R))
        bs.append(jnp.zeros((nz,), jnp.float32))
        nz_1 = nz

    # --- Cayley orthogonalisation (eval-mode cached Q, R) -------------------
    Q = cayley(fq * Fq / jnp.linalg.norm(Fq)).astype(jnp.float32)      # (Z, F)
    Rs = [cayley(fr * Fr / jnp.linalg.norm(Fr)).astype(jnp.float32)
          for Fr, fr in zip(Frs, frs)]                                  # (nz, nz+nz_1)

    # --- run (f32 I/O, exact) ------------------------------------------------
    x = jax.random.normal(k_x, (B, F), jnp.float32)
    y = monlip_forward(x, Q, by, Rs, bs, units, mu, nu)
    y = jax.block_until_ready(y)

    y_ref = monlip_reference(x, Q, by, Rs, bs, units, mu, nu)
    np.testing.assert_allclose(np.asarray(y), np.asarray(y_ref),
                               rtol=2e-3, atol=2e-3)

    # --- run (bf16 I/O + bf16 MXU operands, f32 accum) — v6e/v7x config -----
    y_bf = monlip_forward(x, Q, by, Rs, bs, units, mu, nu,
                          io_dtype=jnp.bfloat16, compute_dtype=jnp.bfloat16)
    y_bf = jax.block_until_ready(y_bf)
    np.testing.assert_allclose(np.asarray(y_bf, dtype=np.float32),
                               np.asarray(y_ref), rtol=5e-2, atol=2.5e-1)

    print("KERNEL_OK")
</pallas_src>

<mosaic_0001>
module attributes {stable_mosaic.version = 11 : i64} {
  func.func @kernel(%arg0: i32, %arg1: memref<512x32xf32, #tpu.memory_space<vmem>>, %arg2: memref<32x32xf32, #tpu.memory_space<vmem>>, %arg3: memref<1x32xf32, #tpu.memory_space<vmem>>, %arg4: memref<16x16xf32, #tpu.memory_space<vmem>>, %arg5: memref<16x32xf32, #tpu.memory_space<vmem>>, %arg6: memref<16x1xf32, #tpu.memory_space<vmem>>, %arg7: memref<16x1xf32, #tpu.memory_space<vmem>>, %arg8: memref<512x32xf32, #tpu.memory_space<vmem>>) attributes {dimension_semantics = [#tpu.dimension_semantics<parallel>], iteration_bounds = array<i64: 2>, scalar_prefetch = 0 : i64, scratch_operands = 0 : i64, tpu.core_type = #tpu.core_type<tc>, window_params = [{transform_indices = @transform_0, window_bounds = array<i64: 512, 32>}, {pipeline_mode = #tpu.pipeline_mode<synchronous>, transform_indices = @transform_1, window_bounds = array<i64: 32, 32>}, {pipeline_mode = #tpu.pipeline_mode<synchronous>, transform_indices = @transform_2, window_bounds = array<i64: 1, 32>}, {pipeline_mode = #tpu.pipeline_mode<synchronous>, transform_indices = @transform_3, window_bounds = array<i64: 16, 16>}, {pipeline_mode = #tpu.pipeline_mode<synchronous>, transform_indices = @transform_4, window_bounds = array<i64: 16, 32>}, {pipeline_mode = #tpu.pipeline_mode<synchronous>, transform_indices = @transform_5, window_bounds = array<i64: 16, 1>}, {pipeline_mode = #tpu.pipeline_mode<synchronous>, transform_indices = @transform_6, window_bounds = array<i64: 16, 1>}, {transform_indices = @transform_7, window_bounds = array<i64: 512, 32>}]} {
    %c0 = arith.constant 0 : index
    %c0_0 = arith.constant 0 : index
    %0 = vector.load %arg2[%c0, %c0_0] : memref<32x32xf32, #tpu.memory_space<vmem>>, vector<32x32xf32>
    %c0_1 = arith.constant 0 : index
    %c0_2 = arith.constant 0 : index
    %1 = vector.load %arg3[%c0_1, %c0_2] : memref<1x32xf32, #tpu.memory_space<vmem>>, vector<1x32xf32>
    %c0_3 = arith.constant 0 : index
    %c0_4 = arith.constant 0 : index
    %2 = vector.load %arg4[%c0_3, %c0_4] : memref<16x16xf32, #tpu.memory_space<vmem>>, vector<16x16xf32>
    %c0_5 = arith.constant 0 : index
    %c0_6 = arith.constant 0 : index
    %3 = vector.load %arg5[%c0_5, %c0_6] : memref<16x32xf32, #tpu.memory_space<vmem>>, vector<16x32xf32>
    %c0_7 = arith.constant 0 : index
    %c0_8 = arith.constant 0 : index
    %4 = vector.load %arg6[%c0_7, %c0_8] : memref<16x1xf32, #tpu.memory_space<vmem>>, vector<16x1xf32>
    %c0_9 = arith.constant 0 : index
    %c0_10 = arith.constant 0 : index
    %5 = vector.load %arg7[%c0_9, %c0_10] : memref<16x1xf32, #tpu.memory_space<vmem>>, vector<16x1xf32>
    %c0_i32 = arith.constant 0 : i32
    %c2_i32 = arith.constant 2 : i32
    %6 = arith.addi %c0_i32, %c2_i32 : i32
    %c1_i32 = arith.constant 1 : i32
    scf.for %arg9 = %c0_i32 to %6 step %c1_i32  : i32 {
      %c256_i32 = arith.constant 256 : i32
      %7 = arith.muli %arg9, %c256_i32 : i32
      %8 = tpu.assume_multiple %7, 256 : i32
      %9 = arith.index_cast %8 : i32 to index
      %c0_12 = arith.constant 0 : index
      %10 = vector.load %arg1[%9, %c0_12] : memref<512x32xf32, #tpu.memory_space<vmem>>, vector<256x32xf32>
      %cst = arith.constant dense<0.000000e+00> : vector<32x256xf32>
      %11 = tpu.matmul %0, %10, %cst {dimension_numbers = #tpu.dot_dimension_numbers<[1], [1], [0], [0], [0, 0, 1, 0], [], []>} : vector<32x32xf32>, vector<256x32xf32>, vector<32x256xf32> -> vector<32x256xf32>
      %cst_13 = arith.constant 3.14642644 : f32
      %12 = vector.broadcast %cst_13 : f32 to vector<32x256xf32>
      %13 = arith.mulf %12, %11 : vector<32x256xf32>
      %14 = vector.extract_strided_slice %13 {offsets = [0, 0], sizes = [16, 256], strides = [1, 1]} : vector<32x256xf32> to vector<16x256xf32>
      %cst_14 = arith.constant dense<0.000000e+00> : vector<16x256xf32>
      %15 = tpu.matmul %2, %14, %cst_14 {dimension_numbers = #tpu.dot_dimension_numbers<[1], [0], [0], [1], [0, 0, 1, 1], [], []>} : vector<16x16xf32>, vector<16x256xf32>, vector<16x256xf32> -> vector<16x256xf32>
      %cst_15 = arith.constant 1.41421354 : f32
      %16 = vector.broadcast %cst_15 : f32 to vector<16x256xf32>
      %17 = arith.mulf %16, %15 : vector<16x256xf32>
      %18 = vector.broadcast %4 : vector<16x1xf32> to vector<16x256xf32>
      %19 = arith.addf %17, %18 : vector<16x256xf32>
      %cst_16 = arith.constant 0.000000e+00 : f32
      %cst_17 = arith.constant 1.000000e+00 : f32
      %20 = vector.broadcast %cst_16 : f32 to vector<16x256xf32>
      %21 = arith.maximumf %20, %19 : vector<16x256xf32>
      %22 = vector.broadcast %cst_17 : f32 to vector<16x256xf32>
      %23 = arith.minimumf %22, %21 : vector<16x256xf32>
      %cst_18 = arith.constant 5.000000e-01 : f32
      %24 = vector.broadcast %cst_18 : f32 to vector<16x256xf32>
      %25 = arith.mulf %24, %23 : vector<16x256xf32>
      %26 = arith.mulf %25, %23 : vector<16x256xf32>
      %cst_19 = arith.constant 1.000000e+00 : f32
      %27 = vector.broadcast %cst_19 : f32 to vector<16x256xf32>
      %28 = arith.subf %19, %27 : vector<16x256xf32>
      %cst_20 = arith.constant 0.000000e+00 : f32
      %29 = vector.broadcast %cst_20 : f32 to vector<16x256xf32>
      %30 = arith.maximumf %28, %29 : vector<16x256xf32>
      %31 = arith.addf %26, %30 : vector<16x256xf32>
      %cst_21 = arith.constant dense<0.000000e+00> : vector<16x256xf32>
      %32 = tpu.matmul %2, %31, %cst_21 {dimension_numbers = #tpu.dot_dimension_numbers<[0], [0], [1], [1], [0, 1, 1, 1], [], []>} : vector<16x16xf32>, vector<16x256xf32>, vector<16x256xf32> -> vector<16x256xf32>
      %cst_22 = arith.constant 1.41421354 : f32
      %33 = vector.broadcast %cst_22 : f32 to vector<16x256xf32>
      %34 = arith.mulf %33, %32 : vector<16x256xf32>
      %35 = arith.subf %34, %14 : vector<16x256xf32>
      %36 = vector.extract_strided_slice %13 {offsets = [16, 0], sizes = [16, 256], strides = [1, 1]} : vector<32x256xf32> to vector<16x256xf32>
      %37 = tpu.concatenate %36, %35 in 0 : vector<16x256xf32>, vector<16x256xf32> -> vector<32x256xf32>
      %cst_23 = arith.constant dense<0.000000e+00> : vector<16x256xf32>
      %38 = tpu.matmul %3, %37, %cst_23 {dimension_numbers = #tpu.dot_dimension_numbers<[1], [0], [0], [1], [0, 0, 1, 1], [], []>} : vector<16x32xf32>, vector<32x256xf32>, vector<16x256xf32> -> vector<16x256xf32>
      %cst_24 = arith.constant 1.41421354 : f32
      %39 = vector.broadcast %cst_24 : f32 to vector<16x256xf32>
      %40 = arith.mulf %39, %38 : vector<16x256xf32>
      %41 = vector.broadcast %5 : vector<16x1xf32> to vector<16x256xf32>
      %42 = arith.addf %40, %41 : vector<16x256xf32>
      %cst_25 = arith.constant 0.000000e+00 : f32
      %cst_26 = arith.constant 1.000000e+00 : f32
      %43 = vector.broadcast %cst_25 : f32 to vector<16x256xf32>
      %44 = arith.maximumf %43, %42 : vector<16x256xf32>
      %45 = vector.broadcast %cst_26 : f32 to vector<16x256xf32>
      %46 = arith.minimumf %45, %44 : vector<16x256xf32>
      %cst_27 = arith.constant 5.000000e-01 : f32
      %47 = vector.broadcast %cst_27 : f32 to vector<16x256xf32>
      %48 = arith.mulf %47, %46 : vector<16x256xf32>
      %49 = arith.mulf %48, %46 : vector<16x256xf32>
      %cst_28 = arith.constant 1.000000e+00 : f32
      %50 = vector.broadcast %cst_28 : f32 to vector<16x256xf32>
      %51 = arith.subf %42, %50 : vector<16x256xf32>
      %cst_29 = arith.constant 0.000000e+00 : f32
      %52 = vector.broadcast %cst_29 : f32 to vector<16x256xf32>
      %53 = arith.maximumf %51, %52 : vector<16x256xf32>
      %54 = arith.addf %49, %53 : vector<16x256xf32>
      %cst_30 = arith.constant dense<0.000000e+00> : vector<32x256xf32>
      %55 = tpu.matmul %3, %54, %cst_30 {dimension_numbers = #tpu.dot_dimension_numbers<[0], [0], [1], [1], [0, 1, 1, 1], [], []>} : vector<16x32xf32>, vector<16x256xf32>, vector<32x256xf32> -> vector<32x256xf32>
      %cst_31 = arith.constant 1.41421354 : f32
      %56 = vector.broadcast %cst_31 : f32 to vector<32x256xf32>
      %57 = arith.mulf %56, %55 : vector<32x256xf32>
      %58 = vector.extract_strided_slice %57 {offsets = [0, 0], sizes = [16, 256], strides = [1, 1]} : vector<32x256xf32> to vector<16x256xf32>
      %59 = arith.subf %58, %36 : vector<16x256xf32>
      %60 = vector.extract_strided_slice %57 {offsets = [16, 0], sizes = [16, 256], strides = [1, 1]} : vector<32x256xf32> to vector<16x256xf32>
      %61 = arith.subf %35, %60 : vector<16x256xf32>
      %62 = tpu.concatenate %61, %59 in 0 : vector<16x256xf32>, vector<16x256xf32> -> vector<32x256xf32>
      %cst_32 = arith.constant dense<0.000000e+00> : vector<256x32xf32>
      %63 = tpu.matmul %62, %0, %cst_32 {dimension_numbers = #tpu.dot_dimension_numbers<[0], [0], [1], [1], [0, 1, 1, 1], [], []>} : vector<32x256xf32>, vector<32x32xf32>, vector<256x32xf32> -> vector<256x32xf32>
      %cst_33 = arith.constant 1.010000e+01 : f32
      %64 = vector.broadcast %cst_33 : f32 to vector<256x32xf32>
      %65 = arith.mulf %64, %10 : vector<256x32xf32>
      %cst_34 = arith.constant 3.14642644 : f32
      %66 = vector.broadcast %cst_34 : f32 to vector<256x32xf32>
      %67 = arith.mulf %66, %63 : vector<256x32xf32>
      %68 = arith.addf %65, %67 : vector<256x32xf32>
      %cst_35 = arith.constant 5.000000e-01 : f32
      %69 = vector.broadcast %cst_35 : f32 to vector<256x32xf32>
      %70 = arith.mulf %69, %68 : vector<256x32xf32>
      %71 = vector.broadcast %1 : vector<1x32xf32> to vector<256x32xf32>
      %72 = arith.addf %70, %71 : vector<256x32xf32>
      %73 = arith.index_cast %8 : i32 to index
      %c0_36 = arith.constant 0 : index
      %74 = vector.load %arg8[%73, %c0_36] : memref<512x32xf32, #tpu.memory_space<vmem>>, vector<256x32xf32>
      tpu.vector_store %arg8[%73, %c0_36], %72 {strides = array<i32>} : memref<512x32xf32, #tpu.memory_space<vmem>>, vector<256x32xf32>,
    }
    %c2_i32_11 = arith.constant 2 : i32
    return
  }
  func.func @transform_0(%arg0: i32) -> (i32, i32) {
    %c0_i32 = arith.constant 0 : i32
    %c0_i32_0 = arith.constant 0 : i32
    return %arg0, %c0_i32 : i32, i32
  }
  func.func @transform_1(%arg0: i32) -> (i32, i32) {
    %c0_i32 = arith.constant 0 : i32
    %c0_i32_0 = arith.constant 0 : i32
    %c0_i32_1 = arith.constant 0 : i32
    return %c0_i32, %c0_i32_0 : i32, i32
  }
  func.func @transform_2(%arg0: i32) -> (i32, i32) {
    %c0_i32 = arith.constant 0 : i32
    %c0_i32_0 = arith.constant 0 : i32
    %c0_i32_1 = arith.constant 0 : i32
    return %c0_i32, %c0_i32_0 : i32, i32
  }
  func.func @transform_3(%arg0: i32) -> (i32, i32) {
    %c0_i32 = arith.constant 0 : i32
    %c0_i32_0 = arith.constant 0 : i32
    %c0_i32_1 = arith.constant 0 : i32
    return %c0_i32, %c0_i32_0 : i32, i32
  }
  func.func @transform_4(%arg0: i32) -> (i32, i32) {
    %c0_i32 = arith.constant 0 : i32
    %c0_i32_0 = arith.constant 0 : i32
    %c0_i32_1 = arith.constant 0 : i32
    return %c0_i32, %c0_i32_0 : i32, i32
  }
  func.func @transform_5(%arg0: i32) -> (i32, i32) {
    %c0_i32 = arith.constant 0 : i32
    %c0_i32_0 = arith.constant 0 : i32
    %c0_i32_1 = arith.constant 0 : i32
    return %c0_i32, %c0_i32_0 : i32, i32
  }
  func.func @transform_6(%arg0: i32) -> (i32, i32) {
    %c0_i32 = arith.constant 0 : i32
    %c0_i32_0 = arith.constant 0 : i32
    %c0_i32_1 = arith.constant 0 : i32
    return %c0_i32, %c0_i32_0 : i32, i32
  }
  func.func @transform_7(%arg0: i32) -> (i32, i32) {
    %c0_i32 = arith.constant 0 : i32
    %c0_i32_0 = arith.constant 0 : i32
    return %arg0, %c0_i32 : i32, i32
  }
}

</mosaic_0001>

<llo_original>
// kernel: tpu_custom_call.1
$region0: #{tpu_custom_call.1}
  #allocation0 [shape = 'u32[]', space=smem, size = 0x4, offset = 0x4, fixed_abs, tag = 'smem constant byte address 0x4 - core index']
  #allocation1 [shape = 'u32[144,128]{1,0:T(1,128)}', space=vmem, size = 0x12000, scoped, tag = 'internal scratch']
  %s0 = inlined_call_operand.vmem [shape: f32[1024,32], index: 0, kind: input, shape index: {}]
  %s1 = inlined_call_operand.vmem [shape: f32[32,32], index: 1, kind: input, shape index: {}]
  %s2 = inlined_call_operand.vmem [shape: f32[1,32], index: 2, kind: input, shape index: {}]
  %s3 = inlined_call_operand.vmem [shape: f32[16,16], index: 3, kind: input, shape index: {}]
  %s4 = inlined_call_operand.vmem [shape: f32[16,32], index: 4, kind: input, shape index: {}]
  %s5 = inlined_call_operand.vmem [shape: f32[16,1], index: 5, kind: input, shape index: {}]
  %s6 = inlined_call_operand.vmem [shape: f32[16,1], index: 6, kind: input, shape index: {}]
  %s7 = inlined_call_operand.vmem [shape: f32[1024,32], index: 7, kind: output, shape index: {}]
  %s8 = sld [smem:[#allocation0]]
  $region68: #{tpu_custom_call.1} parent=0
    _
  %s10 = ssub.s32 1, %s8
  %s11 = scalar_select 0, %s10, %s8
  loop: start=0, step=1, limit=4
  $region2: #{tpu_custom_call.1} parent=0 // loop_pre_header
    _
  $region3: #{tpu_custom_call.1} parent=0 // loop_header
    %s13 = sphi 0, %s17
    %p14 = scmp.ge.s32.totalorder %s13, 4
    %s23 = sphi 0, %s25
    %s26 = sphi 0, %s23
    %s27 = sphi 0, %s26
    %s43 = sphi 0, %s27
    %s47 = sphi 0, %s47
    %s49 = sphi 0, %s47
    %s50 = sphi 0, %s49
    %s64 = sphi 0, %s50
    %s68 = sphi 0, %s68
    %s70 = sphi 0, %s68
    %s71 = sphi 0, %s70
    %s85 = sphi 0, %s71
    %s89 = sphi 0, %s89
    %s91 = sphi 0, %s89
    %s92 = sphi 0, %s91
    %s106 = sphi 0, %s92
    %s110 = sphi 0, %s110
    %s112 = sphi 0, %s110
    %s113 = sphi 0, %s112
    %s127 = sphi 0, %s113
    %s131 = sphi 0, %s131
    %s133 = sphi 0, %s131
    %s134 = sphi 0, %s133
    %s148 = sphi 0, %s134
    %s152 = sphi 0, %s152
    %s154 = sphi 0, %s152
    %s155 = sphi 0, %s154
    %s169 = sphi 0, %s155
    %s175 = sphi 0, %s177
    %s178 = sphi 0, %s175
    %s179 = sphi 0, %s178
    %s195 = sphi 0, %s179
  $region4: #{tpu_custom_call.1} parent=0 // loop_header_branch
    %16 = sbr.rel (%p14) target = $region8
  $region5: #{tpu_custom_call.1} parent=0 // loop_body
    %s18 = ssub.s32 %s13, 1
    %s19 = ssub.s32 %s13, 2
    %s20 = sadd.s32 %s13, 1
    %s21 = ssub.s32 %s13, %s20
    %p22 = scmp.eq.s32.totalorder %s21, 0
    %s24 = sadd.s32 %s23, 1
    %s25 = scalar_select %p22, %s23, %s24
    %p28 = pneg %p22
    %p29 = scmp.eq.s32.totalorder %s13, 1
    %p30 = por %p28, %p29
    %p31 = scmp.ne.s32.totalorder %s23, %s26
    %p32 = scmp.eq.s32.totalorder %s13, 0
    %p33 = por %p31, %p32
    %p34 = scmp.ne.s32.totalorder %s23, %s26
    %p35 = scmp.eq.s32.totalorder %s18, 1
    %p36 = por %p34, %p35
    %p37 = scmp.ne.s32.totalorder %s26, %s27
    %p38 = scmp.eq.s32.totalorder %s18, 0
    %p39 = por %p37, %p38
    %p40 = scmp.ne.s32.totalorder %s26, %s27
    %p41 = scmp.eq.s32.totalorder %s19, 1
    %p42 = por %p40, %p41
    %p44 = scmp.ne.s32.totalorder %s27, %s43
    %p45 = scmp.eq.s32.totalorder %s19, 0
    %p46 = por %p44, %p45
    %s48 = sadd.s32 %s47, 1
    %p51 = scmp.eq.s32.totalorder %s13, 1
    %p52 = scmp.ne.s32.totalorder %s47, %s49
    %p53 = scmp.eq.s32.totalorder %s13, 0
    %p54 = por %p52, %p53
    %p55 = scmp.ne.s32.totalorder %s47, %s49
    %p56 = scmp.eq.s32.totalorder %s18, 1
    %p57 = por %p55, %p56
    %p58 = scmp.ne.s32.totalorder %s49, %s50
    %p59 = scmp.eq.s32.totalorder %s18, 0
    %p60 = por %p58, %p59
    %p61 = scmp.ne.s32.totalorder %s49, %s50
    %p62 = scmp.eq.s32.totalorder %s19, 1
    %p63 = por %p61, %p62
    %p65 = scmp.ne.s32.totalorder %s50, %s64
    %p66 = scmp.eq.s32.totalorder %s19, 0
    %p67 = por %p65, %p66
    %s69 = sadd.s32 %s68, 1
    %p72 = scmp.eq.s32.totalorder %s13, 1
    %p73 = scmp.ne.s32.totalorder %s68, %s70
    %p74 = scmp.eq.s32.totalorder %s13, 0
    %p75 = por %p73, %p74
    %p76 = scmp.ne.s32.totalorder %s68, %s70
    %p77 = scmp.eq.s32.totalorder %s18, 1
    %p78 = por %p76, %p77
    %p79 = scmp.ne.s32.totalorder %s70, %s71
    %p80 = scmp.eq.s32.totalorder %s18, 0
    %p81 = por %p79, %p80
    %p82 = scmp.ne.s32.totalorder %s70, %s71
    %p83 = scmp.eq.s32.totalorder %s19, 1
    %p84 = por %p82, %p83
    %p86 = scmp.ne.s32.totalorder %s71, %s85
    %p87 = scmp.eq.s32.totalorder %s19, 0
    %p88 = por %p86, %p87
    %s90 = sadd.s32 %s89, 1
    %p93 = scmp.eq.s32.totalorder %s13, 1
    %p94 = scmp.ne.s32.totalorder %s89, %s91
    %p95 = scmp.eq.s32.totalorder %s13, 0
    %p96 = por %p94, %p95
    %p97 = scmp.ne.s32.totalorder %s89, %s91
    %p98 = scmp.eq.s32.totalorder %s18, 1
    %p99 = por %p97, %p98
    %p100 = scmp.ne.s32.totalorder %s91, %s92
    %p101 = scmp.eq.s32.totalorder %s18, 0
    %p102 = por %p100, %p101
    %p103 = scmp.ne.s32.totalorder %s91, %s92
    %p104 = scmp.eq.s32.totalorder %s19, 1
    %p105 = por %p103, %p104
    %p107 = scmp.ne.s32.totalorder %s92, %s106
    %p108 = scmp.eq.s32.totalorder %s19, 0
    %p109 = por %p107, %p108
    %s111 = sadd.s32 %s110, 1
    %p114 = scmp.eq.s32.totalorder %s13, 1
    %p115 = scmp.ne.s32.totalorder %s110, %s112
    %p116 = scmp.eq.s32.totalorder %s13, 0
    %p117 = por %p115, %p116
    %p118 = scmp.ne.s32.totalorder %s110, %s112
    %p119 = scmp.eq.s32.totalorder %s18, 1
    %p120 = por %p118, %p119
    %p121 = scmp.ne.s32.totalorder %s112, %s113
    %p122 = scmp.eq.s32.totalorder %s18, 0
    %p123 = por %p121, %p122
    %p124 = scmp.ne.s32.totalorder %s112, %s113
    %p125 = scmp.eq.s32.totalorder %s19, 1
    %p126 = por %p124, %p125
    %p128 = scmp.ne.s32.totalorder %s113, %s127
    %p129 = scmp.eq.s32.totalorder %s19, 0
    %p130 = por %p128, %p129
    %s132 = sadd.s32 %s131, 1
    %p135 = scmp.eq.s32.totalorder %s13, 1
    %p136 = scmp.ne.s32.totalorder %s131, %s133
    %p137 = scmp.eq.s32.totalorder %s13, 0
    %p138 = por %p136, %p137
    %p139 = scmp.ne.s32.totalorder %s131, %s133
    %p140 = scmp.eq.s32.totalorder %s18, 1
    %p141 = por %p139, %p140
    %p142 = scmp.ne.s32.totalorder %s133, %s134
    %p143 = scmp.eq.s32.totalorder %s18, 0
    %p144 = por %p142, %p143
    %p145 = scmp.ne.s32.totalorder %s133, %s134
    %p146 = scmp.eq.s32.totalorder %s19, 1
    %p147 = por %p145, %p146
    %p149 = scmp.ne.s32.totalorder %s134, %s148
    %p150 = scmp.eq.s32.totalorder %s19, 0
    %p151 = por %p149, %p150
    %s153 = sadd.s32 %s152, 1
    %p156 = scmp.eq.s32.totalorder %s13, 1
    %p157 = scmp.ne.s32.totalorder %s152, %s154
    %p158 = scmp.eq.s32.totalorder %s13, 0
    %p159 = por %p157, %p158
    %p160 = scmp.ne.s32.totalorder %s152, %s154
    %p161 = scmp.eq.s32.totalorder %s18, 1
    %p162 = por %p160, %p161
    %p163 = scmp.ne.s32.totalorder %s154, %s155
    %p164 = scmp.eq.s32.totalorder %s18, 0
    %p165 = por %p163, %p164
    %p166 = scmp.ne.s32.totalorder %s154, %s155
    %p167 = scmp.eq.s32.totalorder %s19, 1
    %p168 = por %p166, %p167
    %p170 = scmp.ne.s32.totalorder %s155, %s169
    %p171 = scmp.eq.s32.totalorder %s19, 0
    %p172 = por %p170, %p171
    %s173 = ssub.s32 %s13, %s20
    %p174 = scmp.eq.s32.totalorder %s173, 0
    %s176 = sadd.s32 %s175, 1
    %s177 = scalar_select %p174, %s175, %s176
    %p180 = pneg %p174
    %p181 = scmp.eq.s32.totalorder %s13, 1
    %p182 = por %p180, %p181
    %p183 = scmp.ne.s32.totalorder %s175, %s178
    %p184 = scmp.eq.s32.totalorder %s13, 0
    %p185 = por %p183, %p184
    %p186 = scmp.ne.s32.totalorder %s175, %s178
    %p187 = scmp.eq.s32.totalorder %s18, 1
    %p188 = por %p186, %p187
    %p189 = scmp.ne.s32.totalorder %s178, %s179
    %p190 = scmp.eq.s32.totalorder %s18, 0
    %p191 = por %p189, %p190
    %p192 = scmp.ne.s32.totalorder %s178, %s179
    %p193 = scmp.eq.s32.totalorder %s19, 1
    %p194 = por %p192, %p193
    %p196 = scmp.ne.s32.totalorder %s179, %s195
    %p197 = scmp.eq.s32.totalorder %s19, 0
    %p198 = por %p196, %p197
    %p199 = scmp.le.s32.totalorder 1, %s13
    %p200 = scmp.lt.s32.totalorder %s13, 3
    %p201 = pnand %p199, %p200
    %p202 = pneg %p201
    // Predicated region
    $region9: #{tpu_custom_call.1} parent=5 // pred_check
      _
    $region10: #{tpu_custom_call.1} parent=5 // pred_check_branch
      %204 = sbr.rel (%p201) target = $region12
    $region11: #{tpu_custom_call.1} parent=5 // pred_region
      %s205 = ssub.s32 %s13, 1
      // Predicated region
      $region13: #{tpu_custom_call.1} parent=11 // pred_check
        %p206 = pneg %p60
      $region14: #{tpu_custom_call.1} parent=11 // pred_check_branch
        %208 = sbr.rel (%p206) target = $region16
      $region15: #{tpu_custom_call.1} parent=11 // pred_region
        _
      $region16: #{tpu_custom_call.1} parent=11 // pred_fallthru
        _
      // Predicated region
      $region17: #{tpu_custom_call.1} parent=11 // pred_check
        %p209 = pneg %p81
      $region18: #{tpu_custom_call.1} parent=11 // pred_check_branch
        %211 = sbr.rel (%p209) target = $region20
      $region19: #{tpu_custom_call.1} parent=11 // pred_region
        _
      $region20: #{tpu_custom_call.1} parent=11 // pred_fallthru
        _
      // Predicated region
      $region21: #{tpu_custom_call.1} parent=11 // pred_check
        %p212 = pneg %p102
      $region22: #{tpu_custom_call.1} parent=11 // pred_check_branch
        %214 = sbr.rel (%p212) target = $region24
      $region23: #{tpu_custom_call.1} parent=11 // pred_region
        _
      $region24: #{tpu_custom_call.1} parent=11 // pred_fallthru
        _
      // Predicated region
      $region25: #{tpu_custom_call.1} parent=11 // pred_check
        %p215 = pneg %p123
      $region26: #{tpu_custom_call.1} parent=11 // pred_check_branch
        %217 = sbr.rel (%p215) target = $region28
      $region27: #{tpu_custom_call.1} parent=11 // pred_region
        _
      $region28: #{tpu_custom_call.1} parent=11 // pred_fallthru
        _
      // Predicated region
      $region29: #{tpu_custom_call.1} parent=11 // pred_check
        %p218 = pneg %p144
      $region30: #{tpu_custom_call.1} parent=11 // pred_check_branch
        %220 = sbr.rel (%p218) target = $region32
      $region31: #{tpu_custom_call.1} parent=11 // pred_region
        _
      $region32: #{tpu_custom_call.1} parent=11 // pred_fallthru
        _
      // Predicated region
      $region33: #{tpu_custom_call.1} parent=11 // pred_check
        %p221 = pneg %p165
      $region34: #{tpu_custom_call.1} parent=11 // pred_check_branch
        %223 = sbr.rel (%p221) target = $region36
      $region35: #{tpu_custom_call.1} parent=11 // pred_region
        _
      $region36: #{tpu_custom_call.1} parent=11 // pred_fallthru
        _
    $region12: #{tpu_custom_call.1} parent=5 // pred_fallthru
      _
    %p224 = scmp.lt.s32.totalorder %s13, 2
    // Predicated region
    $region37: #{tpu_custom_call.1} parent=5 // pred_check
      %p225 = pneg %p224
    $region38: #{tpu_custom_call.1} parent=5 // pred_check_branch
      %227 = sbr.rel (%p225) target = $region40
    $region39: #{tpu_custom_call.1} parent=5 // pred_region
      // Predicated region
      $region41: #{tpu_custom_call.1} parent=39 // pred_check
        %p228 = pneg %p33
      $region42: #{tpu_custom_call.1} parent=39 // pred_check_branch
        %230 = sbr.rel (%p228) target = $region44
      $region43: #{tpu_custom_call.1} parent=39 // pred_region
        %s231 = smul.u32 64, %s13
        %p232 = scmp.lt.s32.totalorder %s231, 127
        %s233 = scalar_select %p232, %s231, 127
        %s234 = smul.addr %s233, 8
        %s235 = scalar_lea.vmem %s0, %s234
        %s236 = smul.u32 64, %s13
      $region44: #{tpu_custom_call.1} parent=39 // pred_fallthru
        _
    $region40: #{tpu_custom_call.1} parent=5 // pred_fallthru
      _
    %p237 = scmp.le.s32.totalorder 1, %s13
    %p238 = scmp.lt.s32.totalorder %s13, 3
    %p239 = pnand %p237, %p238
    %p240 = pneg %p239
    // Predicated region
    $region45: #{tpu_custom_call.1} parent=5 // pred_check
      _
    $region46: #{tpu_custom_call.1} parent=5 // pred_check_branch
      %242 = sbr.rel (%p239) target = $region48
    $region47: #{tpu_custom_call.1} parent=5 // pred_region
      %s243 = ssub.s32 %s13, 1
      %s244 = smul.u32 64, %s18
      %p245 = scmp.lt.s32.totalorder %s244, 127
      %s246 = scalar_select %p245, %s244, 127
      %s247 = smul.addr %s246, 8
      %s248 = scalar_lea.vmem %s0, %s247
      %p249 = pneg %p39
      %p250 = pneg %p36
      %p251 = pneg %p60
      %p252 = pneg %p57
      %p253 = pneg %p81
      %p254 = pneg %p78
      %p255 = pneg %p102
      %p256 = pneg %p99
      %p257 = pneg %p123
      %p258 = pneg %p120
      %p259 = pneg %p144
      %p260 = pneg %p141
      %p261 = pneg %p165
      %p262 = pneg %p162
      %p263 = pneg %p191
      %p264 = pneg %p188
      %s265 = smul.u32 64, %s18
      %p266 = scmp.lt.s32.totalorder %s265, 127
      %s267 = scalar_select %p266, %s265, 127
      %s268 = smul.addr %s267, 8
      %s269 = scalar_lea.vmem %s7, %s268
      %s270 = smul.u32 64, %s18
      %p271 = scmp.lt.s32.totalorder %s270, 127
      %s272 = scalar_select %p271, %s270, 127
      %s273 = smul.addr %s272, 8
      %s274 = scalar_lea.vmem %s0, %s273
      %s275 = smul.u32 64, %s18
      %s276 = smul.u32 64, %s18
      %p277 = scmp.lt.s32.totalorder %s276, 127
      %s278 = scalar_select %p277, %s276, 127
      %s279 = smul.addr %s278, 8
      %s280 = scalar_lea.vmem %s7, %s279
      %s281 = smul.u32 64, %s18
      %v282 = vld [vmem:[%s1] sm:$0xff]
      %v283 = vld [vmem:[%s1 + $0x8] sm:$0xff]
      %v284 = vld [vmem:[%s1 + $0x10] sm:$0xff]
      %v285 = vld [vmem:[%s1 + $0x18] sm:$0xff]
      %v286 = vld [vmem:[%s2] sm:$0x1]
      %v287 = vld [vmem:[%s3] sm:$0xff]
      %v288 = vld [vmem:[%s3 + $0x8] sm:$0xff]
      %v289 = vld [vmem:[%s4] sm:$0xff]
      %v290 = vld [vmem:[%s4 + $0x8] sm:$0xff]
      %v291 = vld [vmem:[%s5] sm:$0xff]
      %v292 = vld [vmem:[%s5 + $0x8] sm:$0xff]
      %v293 = vld [vmem:[%s6] sm:$0xff]
      %v294 = vld [vmem:[%s6 + $0x8] sm:$0xff]
      loop: start=0, step=1, limit=2
      $region49: #{tpu_custom_call.1} parent=47 // loop_pre_header
        _
      $region50: #{tpu_custom_call.1} parent=47 // loop_header
        %s296 = sphi 0, %s300
        %p297 = scmp.ge.s32.totalorder %s296, 2
      $region51: #{tpu_custom_call.1} parent=47 // loop_header_branch
        %299 = sbr.rel (%p297) target = $region55
      $region52: #{tpu_custom_call.1} parent=47 // loop_body
        %s301 = smul.u32 %s296, 256
        %s302 = scalar_lea.vmem %s274, %s301
        %v303 = vld [vmem:[%s302] sm:$0xff]
        %v304 = vld [vmem:[%s302 + $0x8] sm:$0xff]
        %v305 = vld [vmem:[%s302 + $0x10] sm:$0xff]
        %v306 = vld [vmem:[%s302 + $0x18] sm:$0xff]
        %v307 = vld [vmem:[%s302 + $0x20] sm:$0xff]
        %v308 = vld [vmem:[%s302 + $0x28] sm:$0xff]
        %v309 = vld [vmem:[%s302 + $0x30] sm:$0xff]
        %v310 = vld [vmem:[%s302 + $0x38] sm:$0xff]
        %v311 = vld [vmem:[%s302 + $0x40] sm:$0xff]
        %v312 = vld [vmem:[%s302 + $0x48] sm:$0xff]
        %v313 = vld [vmem:[%s302 + $0x50] sm:$0xff]
        %v314 = vld [vmem:[%s302 + $0x58] sm:$0xff]
        %v315 = vld [vmem:[%s302 + $0x60] sm:$0xff]
        %v316 = vld [vmem:[%s302 + $0x68] sm:$0xff]
        %v317 = vld [vmem:[%s302 + $0x70] sm:$0xff]
        %v318 = vld [vmem:[%s302 + $0x78] sm:$0xff]
        %v319 = vld [vmem:[%s302 + $0x80] sm:$0xff]
        %v320 = vld [vmem:[%s302 + $0x88] sm:$0xff]
        %v321 = vld [vmem:[%s302 + $0x90] sm:$0xff]
        %v322 = vld [vmem:[%s302 + $0x98] sm:$0xff]
        %v323 = vld [vmem:[%s302 + $0xa0] sm:$0xff]
        %v324 = vld [vmem:[%s302 + $0xa8] sm:$0xff]
        %v325 = vld [vmem:[%s302 + $0xb0] sm:$0xff]
        %v326 = vld [vmem:[%s302 + $0xb8] sm:$0xff]
        %v327 = vld [vmem:[%s302 + $0xc0] sm:$0xff]
        %v328 = vld [vmem:[%s302 + $0xc8] sm:$0xff]
        %v329 = vld [vmem:[%s302 + $0xd0] sm:$0xff]
        %v330 = vld [vmem:[%s302 + $0xd8] sm:$0xff]
        %v331 = vld [vmem:[%s302 + $0xe0] sm:$0xff]
        %v332 = vld [vmem:[%s302 + $0xe8] sm:$0xff]
        %v333 = vld [vmem:[%s302 + $0xf0] sm:$0xff]
        %v334 = vld [vmem:[%s302 + $0xf8] sm:$0xff]
        %vm335 = vcmask 261120
        %v337 = vsel %vm335, %v282, 0
        %v340 = vsel %vm335, %v283, 0
        %v343 = vsel %vm335, %v284, 0
        %v346 = vsel %vm335, %v285, 0
        %v349 = vsel %vm335, %v303, 0
        %v352 = vsel %vm335, %v304, 0
        %v355 = vsel %vm335, %v305, 0
        %v358 = vsel %vm335, %v306, 0
        %v361 = vsel %vm335, %v307, 0
        %v364 = vsel %vm335, %v308, 0
        %v367 = vsel %vm335, %v309, 0
        %v370 = vsel %vm335, %v310, 0
        %v373 = vsel %vm335, %v311, 0
        %v376 = vsel %vm335, %v312, 0
        %v379 = vsel %vm335, %v313, 0
        %v382 = vsel %vm335, %v314, 0
        %v385 = vsel %vm335, %v315, 0
        %v388 = vsel %vm335, %v316, 0
        %v391 = vsel %vm335, %v317, 0
        %v394 = vsel %vm335, %v318, 0
        %v397 = vsel %vm335, %v319, 0
        %v400 = vsel %vm335, %v320, 0
        %v403 = vsel %vm335, %v321, 0
        %v406 = vsel %vm335, %v322, 0
        %v409 = vsel %vm335, %v323, 0
        %v412 = vsel %vm335, %v324, 0
        %v415 = vsel %vm335, %v325, 0
        %v418 = vsel %vm335, %v326, 0
        %v421 = vsel %vm335, %v327, 0
        %v424 = vsel %vm335, %v328, 0
        %v427 = vsel %vm335, %v329, 0
        %v430 = vsel %vm335, %v330, 0
        %v433 = vsel %vm335, %v331, 0
        %v436 = vsel %vm335, %v332, 0
        %v439 = vsel %vm335, %v333, 0
        %v442 = vsel %vm335, %v334, 0
        %444 = vmatprep.subr.mxu0 0.0
        %445 = vmatpush1.xpose.msra.mxu0 %v349
        %446 = vmatprep.subr.mxu0 0.0
        %447 = vmatpush1.xpose.msra.mxu0 %v352
        %448 = vmatprep.subr.mxu0 0.0
        %449 = vmatpush1.xpose.msra.mxu0 %v355
        %450 = vmatprep.subr.mxu0 0.0
        %451 = vmatpush1.xpose.msra.mxu0 %v358
        %452 = vmatprep.subr.mxu0 0.0
        %453 = vmatpush1.xpose.msra.mxu0 %v361
        %454 = vmatprep.subr.mxu0 0.0
        %455 = vmatpush1.xpose.msra.mxu0 %v364
        %456 = vmatprep.subr.mxu0 0.0
        %457 = vmatpush1.xpose.msra.mxu0 %v367
        %458 = vmatprep.subr.mxu0 0.0
        %459 = vmatpush1.xpose.msra.mxu0 %v370
        %460 = vmatprep.subr.mxu0 0.0
        %461 = vmatpush1.xpose.msra.mxu0 %v373
        %462 = vmatprep.subr.mxu0 0.0
        %463 = vmatpush1.xpose.msra.mxu0 %v376
        %464 = vmatprep.subr.mxu0 0.0
        %465 = vmatpush1.xpose.msra.mxu0 %v379
        %466 = vmatprep.subr.mxu0 0.0
        %467 = vmatpush1.xpose.msra.mxu0 %v382
        %468 = vmatprep.subr.mxu0 0.0
        %469 = vmatpush1.xpose.msra.mxu0 %v385
        %470 = vmatprep.subr.mxu0 0.0
        %471 = vmatpush1.xpose.msra.mxu0 %v388
        %472 = vmatprep.subr.mxu0 0.0
        %473 = vmatpush1.xpose.msra.mxu0 %v391
        %474 = vmatprep.subr.mxu0 0.0
        %475 = vmatpush1.xpose.msra.mxu0 %v394
        %476 = vmatprep.subr.mxu0 0.0
        %477 = vmatpush1.xpose.msra.mxu0 %v397
        %478 = vmatprep.subr.mxu0 0.0
        %479 = vmatpush1.xpose.msra.mxu0 %v400
        %480 = vmatprep.subr.mxu0 0.0
        %481 = vmatpush1.xpose.msra.mxu0 %v403
        %482 = vmatprep.subr.mxu0 0.0
        %483 = vmatpush1.xpose.msra.mxu0 %v406
        %484 = vmatprep.subr.mxu0 0.0
        %485 = vmatpush1.xpose.msra.mxu0 %v409
        %486 = vmatprep.subr.mxu0 0.0
        %487 = vmatpush1.xpose.msra.mxu0 %v412
        %488 = vmatprep.subr.mxu0 0.0
        %489 = vmatpush1.xpose.msra.mxu0 %v415
        %490 = vmatprep.subr.mxu0 0.0
        %491 = vmatpush1.xpose.msra.mxu0 %v418
        %492 = vmatprep.subr.mxu0 0.0
        %493 = vmatpush1.xpose.msra.mxu0 %v421
        %494 = vmatprep.subr.mxu0 0.0
        %495 = vmatpush1.xpose.msra.mxu0 %v424
        %496 = vmatprep.subr.mxu0 0.0
        %497 = vmatpush1.xpose.msra.mxu0 %v427
        %498 = vmatprep.subr.mxu0 0.0
        %499 = vmatpush1.xpose.msra.mxu0 %v430
        %500 = vmatprep.subr.mxu0 0.0
        %501 = vmatpush1.xpose.msra.mxu0 %v433
        %502 = vmatprep.subr.mxu0 0.0
        %503 = vmatpush1.xpose.msra.mxu0 %v436
        %504 = vmatprep.subr.mxu0 0.0
        %505 = vmatpush1.xpose.msra.mxu0 %v439
        %506 = vmatprep.subr.mxu0 0.0
        %507 = vmatpush1.xpose.msra.mxu0 %v442
        %508 = vmatprep.mubr.f32.mxu0 0.0
        %509 = vmatmul.mubr.f32.gmra.mrb[0].mxu0 %v337
        %v510 = vpop.f32.mrb[0].mxu0
        %v511 = vadd.f32 0.0, %v510
        %v512 = vpop.f32.mrb[0].mxu0
        %v513 = vadd.f32 0.0, %v512
        %514 = vmatprep.mubr.f32.mxu0 0.0
        %515 = vmatmul.mubr.f32.gmra.mrb[0].mxu0 %v340
        %v516 = vpop.f32.mrb[0].mxu0
        %v517 = vadd.f32 0.0, %v516
        %v518 = vpop.f32.mrb[0].mxu0
        %v519 = vadd.f32 0.0, %v518
        %520 = vmatprep.mubr.f32.mxu0 0.0
        %521 = vmatmul.mubr.f32.gmra.mrb[0].mxu0 %v343
        %v522 = vpop.f32.mrb[0].mxu0
        %v523 = vadd.f32 0.0, %v522
        %v524 = vpop.f32.mrb[0].mxu0
        %v525 = vadd.f32 0.0, %v524
        %526 = vmatprep.mubr.f32.mxu0 0.0
        %527 = vmatmul.mubr.f32.gmra.mrb[0].mxu0 %v346
        %v528 = vpop.f32.mrb[0].mxu0
        %v529 = vadd.f32 0.0, %v528
        %v530 = vpop.f32.mrb[0].mxu0
        %v531 = vadd.f32 0.0, %v530
        %532 = vdwg.mxu0
        %v533 = vmul.f32 %v511, 3.1464264
        %v534 = vmul.f32 %v513, 3.1464264
        %v535 = vmul.f32 %v517, 3.1464264
        %v536 = vmul.f32 %v519, 3.1464264
        %v537 = vmul.f32 %v523, 3.1464264
        %v538 = vmul.f32 %v525, 3.1464264
        %v539 = vmul.f32 %v529, 3.1464264
        %v540 = vmul.f32 %v531, 3.1464264
        %vm541 = vcmask 130048
        %v543 = vsel %vm541, %v287, 0
        %v546 = vsel %vm541, %v288, 0
        %548 = vmatprep.subr.mxu0 %v534
        %549 = vmatpush1.msra.mxu0 %v533
        %550 = vmatprep.subr.mxu0 %v536
        %551 = vmatpush1.msra.mxu0 %v535
        %552 = vmatprep.subr.mxu0 0.0
        %553 = vmatpush1.msra.mxu0 0.0
        %554 = vmatprep.subr.mxu0 0.0
        %555 = vmatpush1.msra.mxu0 0.0
        %556 = vmatprep.subr.mxu0 0.0
        %557 = vmatpush1.msra.mxu0 0.0
        %558 = vmatprep.subr.mxu0 0.0
        %559 = vmatpush1.msra.mxu0 0.0
        %560 = vmatprep.subr.mxu0 0.0
        %561 = vmatpush1.msra.mxu0 0.0
        %562 = vmatprep.subr.mxu0 0.0
        %563 = vmatpush1.msra.mxu0 0.0
        %564 = vmatprep.subr.mxu0 0.0
        %565 = vmatpush1.msra.mxu0 0.0
        %566 = vmatprep.subr.mxu0 0.0
        %567 = vmatpush1.msra.mxu0 0.0
        %568 = vmatprep.subr.mxu0 0.0
        %569 = vmatpush1.msra.mxu0 0.0
        %570 = vmatprep.subr.mxu0 0.0
        %571 = vmatpush1.msra.mxu0 0.0
        %572 = vmatprep.subr.mxu0 0.0
        %573 = vmatpush1.msra.mxu0 0.0
        %574 = vmatprep.subr.mxu0 0.0
        %575 = vmatpush1.msra.mxu0 0.0
        %576 = vmatprep.subr.mxu0 0.0
        %577 = vmatpush1.msra.mxu0 0.0
        %578 = vmatprep.subr.mxu0 0.0
        %579 = vmatpush1.msra.mxu0 0.0
        %580 = vmatprep.subr.mxu0 0.0
        %581 = vmatpush1.msra.mxu0 0.0
        %582 = vmatprep.subr.mxu0 0.0
        %583 = vmatpush1.msra.mxu0 0.0
        %584 = vmatprep.subr.mxu0 0.0
        %585 = vmatpush1.msra.mxu0 0.0
        %586 = vmatprep.subr.mxu0 0.0
        %587 = vmatpush1.msra.mxu0 0.0
        %588 = vmatprep.subr.mxu0 0.0
        %589 = vmatpush1.msra.mxu0 0.0
        %590 = vmatprep.subr.mxu0 0.0
        %591 = vmatpush1.msra.mxu0 0.0
        %592 = vmatprep.subr.mxu0 0.0
        %593 = vmatpush1.msra.mxu0 0.0
        %594 = vmatprep.subr.mxu0 0.0
        %595 = vmatpush1.msra.mxu0 0.0
        %596 = vmatprep.subr.mxu0 0.0
        %597 = vmatpush1.msra.mxu0 0.0
        %598 = vmatprep.subr.mxu0 0.0
        %599 = vmatpush1.msra.mxu0 0.0
        %600 = vmatprep.subr.mxu0 0.0
        %601 = vmatpush1.msra.mxu0 0.0
        %602 = vmatprep.subr.mxu0 0.0
        %603 = vmatpush1.msra.mxu0 0.0
        %604 = vmatprep.subr.mxu0 0.0
        %605 = vmatpush1.msra.mxu0 0.0
        %606 = vmatprep.subr.mxu0 0.0
        %607 = vmatpush1.msra.mxu0 0.0
        %608 = vmatprep.subr.mxu0 0.0
        %609 = vmatpush1.msra.mxu0 0.0
        %610 = vmatprep.subr.mxu0 0.0
        %611 = vmatpush1.msra.mxu0 0.0
        %612 = vmatprep.mubr.f32.mxu0 0.0
        %613 = vmatmul.mubr.f32.gmra.mrb[0].mxu0 %v543
        %v614 = vpop.f32.mrb[0].mxu0
        %v615 = vadd.f32 0.0, %v614
        %v616 = vpop.f32.mrb[0].mxu0
        %v617 = vadd.f32 0.0, %v616
        %618 = vmatprep.mubr.f32.mxu0 0.0
        %619 = vmatmul.mubr.f32.gmra.mrb[0].mxu0 %v546
        %v620 = vpop.f32.mrb[0].mxu0
        %v621 = vadd.f32 0.0, %v620
        %v622 = vpop.f32.mrb[0].mxu0
        %v623 = vadd.f32 0.0, %v622
        %624 = vdwg.mxu0
        %v625 = vmul.f32 %v615, 1.4142135
        %v626 = vmul.f32 %v617, 1.4142135
        %v627 = vmul.f32 %v621, 1.4142135
        %v628 = vmul.f32 %v623, 1.4142135
        %630 = vset.pattern.permute.xlu0 0
        %631 = vperm.xlu0 %630, %v291
        %v632 = vpop.permute.xlu0 %631
        %635 = vset.pattern.permute.xlu0 0
        %636 = vperm.xlu0 %635, %v292
        %v637 = vpop.permute.xlu0 %636
        %v639 = vadd.f32 %v625, %v632
        %v640 = vadd.f32 %v626, %v632
        %v641 = vadd.f32 %v627, %v637
        %v642 = vadd.f32 %v628, %v637
        %v643 = vmax.f32 %v639, 0.0
        %v644 = vmax.f32 %v640, 0.0
        %v645 = vmax.f32 %v641, 0.0
        %v646 = vmax.f32 %v642, 0.0
        %v647 = vmin.f32 %v643, 1.0
        %v648 = vmin.f32 %v644, 1.0
        %v649 = vmin.f32 %v645, 1.0
        %v650 = vmin.f32 %v646, 1.0
        %v651 = vmul.f32 %v647, 0.5
        %v652 = vmul.f32 %v648, 0.5
        %v653 = vmul.f32 %v649, 0.5
        %v654 = vmul.f32 %v650, 0.5
        %v655 = vmul.f32 %v651, %v647
        %v656 = vmul.f32 %v652, %v648
        %v657 = vmul.f32 %v653, %v649
        %v658 = vmul.f32 %v654, %v650
        %v659 = vsub.f32 %v639, 1.0
        %v660 = vsub.f32 %v640, 1.0
        %v661 = vsub.f32 %v641, 1.0
        %v662 = vsub.f32 %v642, 1.0
        %v663 = vmax.f32 %v659, 0.0
        %v664 = vmax.f32 %v660, 0.0
        %v665 = vmax.f32 %v661, 0.0
        %v666 = vmax.f32 %v662, 0.0
        %v667 = vadd.f32 %v655, %v663
        %v668 = vadd.f32 %v656, %v664
        %v669 = vadd.f32 %v657, %v665
        %v670 = vadd.f32 %v658, %v666
        %671 = vxpose.xlu0.b32.start [1/16] %v287, 128
        %672 = vxpose.xlu0.b32.cont [2/16] %v288, 128
        %673 = vxpose.xlu0.b32.cont [3/16] 0.0, 128
        %674 = vxpose.xlu0.b32.cont [4/16] 0.0, 128
        %675 = vxpose.xlu0.b32.cont [5/16] 0.0, 128
        %676 = vxpose.xlu0.b32.cont [6/16] 0.0, 128
        %677 = vxpose.xlu0.b32.cont [7/16] 0.0, 128
        %678 = vxpose.xlu0.b32.cont [8/16] 0.0, 128
        %679 = vxpose.xlu0.b32.cont [9/16] 0.0, 128
        %680 = vxpose.xlu0.b32.cont [10/16] 0.0, 128
        %681 = vxpose.xlu0.b32.cont [11/16] 0.0, 128
        %682 = vxpose.xlu0.b32.cont [12/16] 0.0, 128
        %683 = vxpose.xlu0.b32.cont [13/16] 0.0, 128
        %684 = vxpose.xlu0.b32.cont [14/16] 0.0, 128
        %685 = vxpose.xlu0.b32.cont [15/16] 0.0, 128
        %686 = vxpose.xlu0.b32.end [16/16] 0.0, 128
        %v687 = vpop.trf.xlu0
        %v688 = vpop.trf.xlu0
        %v689 = vpop.trf.xlu0
        %v690 = vpop.trf.xlu0
        %v691 = vpop.trf.xlu0
        %v692 = vpop.trf.xlu0
        %v693 = vpop.trf.xlu0
        %v694 = vpop.trf.xlu0
        %v695 = vpop.trf.xlu0
        %v696 = vpop.trf.xlu0
        %v697 = vpop.trf.xlu0
        %v698 = vpop.trf.xlu0
        %v699 = vpop.trf.xlu0
        %v700 = vpop.trf.xlu0
        %v701 = vpop.trf.xlu0
        %v702 = vpop.trf.xlu0
        %v704 = vsel %vm541, %v687, 0
        %v707 = vsel %vm541, %v688, 0
        %709 = vmatprep.subr.mxu0 %v668
        %710 = vmatpush1.msra.mxu0 %v667
        %711 = vmatprep.subr.mxu0 %v670
        %712 = vmatpush1.msra.mxu0 %v669
        %713 = vmatprep.subr.mxu0 0.0
        %714 = vmatpush1.msra.mxu0 0.0
        %715 = vmatprep.subr.mxu0 0.0
        %716 = vmatpush1.msra.mxu0 0.0
        %717 = vmatprep.subr.mxu0 0.0
        %718 = vmatpush1.msra.mxu0 0.0
        %719 = vmatprep.subr.mxu0 0.0
        %720 = vmatpush1.msra.mxu0 0.0
        %721 = vmatprep.subr.mxu0 0.0
        %722 = vmatpush1.msra.mxu0 0.0
        %723 = vmatprep.subr.mxu0 0.0
        %724 = vmatpush1.msra.mxu0 0.0
        %725 = vmatprep.subr.mxu0 0.0
        %726 = vmatpush1.msra.mxu0 0.0
        %727 = vmatprep.subr.mxu0 0.0
        %728 = vmatpush1.msra.mxu0 0.0
        %729 = vmatprep.subr.mxu0 0.0
        %730 = vmatpush1.msra.mxu0 0.0
        %731 = vmatprep.subr.mxu0 0.0
        %732 = vmatpush1.msra.mxu0 0.0
        %733 = vmatprep.subr.mxu0 0.0
        %734 = vmatpush1.msra.mxu0 0.0
        %735 = vmatprep.subr.mxu0 0.0
        %736 = vmatpush1.msra.mxu0 0.0
        %737 = vmatprep.subr.mxu0 0.0
        %738 = vmatpush1.msra.mxu0 0.0
        %739 = vmatprep.subr.mxu0 0.0
        %740 = vmatpush1.msra.mxu0 0.0
        %741 = vmatprep.subr.mxu0 0.0
        %742 = vmatpush1.msra.mxu0 0.0
        %743 = vmatprep.subr.mxu0 0.0
        %744 = vmatpush1.msra.mxu0 0.0
        %745 = vmatprep.subr.mxu0 0.0
        %746 = vmatpush1.msra.mxu0 0.0
        %747 = vmatprep.subr.mxu0 0.0
        %748 = vmatpush1.msra.mxu0 0.0
        %749 = vmatprep.subr.mxu0 0.0
        %750 = vmatpush1.msra.mxu0 0.0
        %751 = vmatprep.subr.mxu0 0.0
        %752 = vmatpush1.msra.mxu0 0.0
        %753 = vmatprep.subr.mxu0 0.0
        %754 = vmatpush1.msra.mxu0 0.0
        %755 = vmatprep.subr.mxu0 0.0
        %756 = vmatpush1.msra.mxu0 0.0
        %757 = vmatprep.subr.mxu0 0.0
        %758 = vmatpush1.msra.mxu0 0.0
        %759 = vmatprep.subr.mxu0 0.0
        %760 = vmatpush1.msra.mxu0 0.0
        %761 = vmatprep.subr.mxu0 0.0
        %762 = vmatpush1.msra.mxu0 0.0
        %763 = vmatprep.subr.mxu0 0.0
        %764 = vmatpush1.msra.mxu0 0.0
        %765 = vmatprep.subr.mxu0 0.0
        %766 = vmatpush1.msra.mxu0 0.0
        %767 = vmatprep.subr.mxu0 0.0
        %768 = vmatpush1.msra.mxu0 0.0
        %769 = vmatprep.subr.mxu0 0.0
        %770 = vmatpush1.msra.mxu0 0.0
        %771 = vmatprep.subr.mxu0 0.0
        %772 = vmatpush1.msra.mxu0 0.0
        %773 = vmatprep.mubr.f32.mxu0 0.0
        %774 = vmatmul.mubr.f32.gmra.mrb[0].mxu0 %v704
        %v775 = vpop.f32.mrb[0].mxu0
        %v776 = vadd.f32 0.0, %v775
        %v777 = vpop.f32.mrb[0].mxu0
        %v778 = vadd.f32 0.0, %v777
        %779 = vmatprep.mubr.f32.mxu0 0.0
        %780 = vmatmul.mubr.f32.gmra.mrb[0].mxu0 %v707
        %v781 = vpop.f32.mrb[0].mxu0
        %v782 = vadd.f32 0.0, %v781
        %v783 = vpop.f32.mrb[0].mxu0
        %v784 = vadd.f32 0.0, %v783
        %785 = vdwg.mxu0
        %v786 = vmul.f32 %v776, 1.4142135
        %v787 = vmul.f32 %v778, 1.4142135
        %v788 = vmul.f32 %v782, 1.4142135
        %v789 = vmul.f32 %v784, 1.4142135
        %v790 = vsub.f32 %v786, %v533
        %v791 = vsub.f32 %v787, %v534
        %v792 = vsub.f32 %v788, %v535
        %v793 = vsub.f32 %v789, %v536
        %v795 = vsel %vm335, %v289, 0
        %v798 = vsel %vm335, %v290, 0
        %800 = vmatprep.subr.mxu0 %v538
        %801 = vmatpush1.msra.mxu0 %v537
        %802 = vmatprep.subr.mxu0 %v540
        %803 = vmatpush1.msra.mxu0 %v539
        %804 = vmatprep.subr.mxu0 %v791
        %805 = vmatpush1.msra.mxu0 %v790
        %806 = vmatprep.subr.mxu0 %v793
        %807 = vmatpush1.msra.mxu0 %v792
        %808 = vmatprep.subr.mxu0 0.0
        %809 = vmatpush1.msra.mxu0 0.0
        %810 = vmatprep.subr.mxu0 0.0
        %811 = vmatpush1.msra.mxu0 0.0
        %812 = vmatprep.subr.mxu0 0.0
        %813 = vmatpush1.msra.mxu0 0.0
        %814 = vmatprep.subr.mxu0 0.0
        %815 = vmatpush1.msra.mxu0 0.0
        %816 = vmatprep.subr.mxu0 0.0
        %817 = vmatpush1.msra.mxu0 0.0
        %818 = vmatprep.subr.mxu0 0.0
        %819 = vmatpush1.msra.mxu0 0.0
        %820 = vmatprep.subr.mxu0 0.0
        %821 = vmatpush1.msra.mxu0 0.0
        %822 = vmatprep.subr.mxu0 0.0
        %823 = vmatpush1.msra.mxu0 0.0
        %824 = vmatprep.subr.mxu0 0.0
        %825 = vmatpush1.msra.mxu0 0.0
        %826 = vmatprep.subr.mxu0 0.0
        %827 = vmatpush1.msra.mxu0 0.0
        %828 = vmatprep.subr.mxu0 0.0
        %829 = vmatpush1.msra.mxu0 0.0
        %830 = vmatprep.subr.mxu0 0.0
        %831 = vmatpush1.msra.mxu0 0.0
        %832 = vmatprep.subr.mxu0 0.0
        %833 = vmatpush1.msra.mxu0 0.0
        %834 = vmatprep.subr.mxu0 0.0
        %835 = vmatpush1.msra.mxu0 0.0
        %836 = vmatprep.subr.mxu0 0.0
        %837 = vmatpush1.msra.mxu0 0.0
        %838 = vmatprep.subr.mxu0 0.0
        %839 = vmatpush1.msra.mxu0 0.0
        %840 = vmatprep.subr.mxu0 0.0
        %841 = vmatpush1.msra.mxu0 0.0
        %842 = vmatprep.subr.mxu0 0.0
        %843 = vmatpush1.msra.mxu0 0.0
        %844 = vmatprep.subr.mxu0 0.0
        %845 = vmatpush1.msra.mxu0 0.0
        %846 = vmatprep.subr.mxu0 0.0
        %847 = vmatpush1.msra.mxu0 0.0
        %848 = vmatprep.subr.mxu0 0.0
        %849 = vmatpush1.msra.mxu0 0.0
        %850 = vmatprep.subr.mxu0 0.0
        %851 = vmatpush1.msra.mxu0 0.0
        %852 = vmatprep.subr.mxu0 0.0
        %853 = vmatpush1.msra.mxu0 0.0
        %854 = vmatprep.subr.mxu0 0.0
        %855 = vmatpush1.msra.mxu0 0.0
        %856 = vmatprep.subr.mxu0 0.0
        %857 = vmatpush1.msra.mxu0 0.0
        %858 = vmatprep.subr.mxu0 0.0
        %859 = vmatpush1.msra.mxu0 0.0
        %860 = vmatprep.subr.mxu0 0.0
        %861 = vmatpush1.msra.mxu0 0.0
        %862 = vmatprep.subr.mxu0 0.0
        %863 = vmatpush1.msra.mxu0 0.0
        %864 = vmatprep.mubr.f32.mxu0 0.0
        %865 = vmatmul.mubr.f32.gmra.mrb[0].mxu0 %v795
        %v866 = vpop.f32.mrb[0].mxu0
        %v867 = vadd.f32 0.0, %v866
        %v868 = vpop.f32.mrb[0].mxu0
        %v869 = vadd.f32 0.0, %v868
        %870 = vmatprep.mubr.f32.mxu0 0.0
        %871 = vmatmul.mubr.f32.gmra.mrb[0].mxu0 %v798
        %v872 = vpop.f32.mrb[0].mxu0
        %v873 = vadd.f32 0.0, %v872
        %v874 = vpop.f32.mrb[0].mxu0
        %v875 = vadd.f32 0.0, %v874
        %876 = vdwg.mxu0
        %v877 = vmul.f32 %v867, 1.4142135
        %v878 = vmul.f32 %v869, 1.4142135
        %v879 = vmul.f32 %v873, 1.4142135
        %v880 = vmul.f32 %v875, 1.4142135
        %882 = vset.pattern.permute.xlu0 0
        %883 = vperm.xlu0 %882, %v293
        %v884 = vpop.permute.xlu0 %883
        %887 = vset.pattern.permute.xlu0 0
        %888 = vperm.xlu0 %887, %v294
        %v889 = vpop.permute.xlu0 %888
        %v891 = vadd.f32 %v877, %v884
        %v892 = vadd.f32 %v878, %v884
        %v893 = vadd.f32 %v879, %v889
        %v894 = vadd.f32 %v880, %v889
        %v895 = vmax.f32 %v891, 0.0
        %v896 = vmax.f32 %v892, 0.0
        %v897 = vmax.f32 %v893, 0.0
        %v898 = vmax.f32 %v894, 0.0
        %v899 = vmin.f32 %v895, 1.0
        %v900 = vmin.f32 %v896, 1.0
        %v901 = vmin.f32 %v897, 1.0
        %v902 = vmin.f32 %v898, 1.0
        %v903 = vmul.f32 %v899, 0.5
        %v904 = vmul.f32 %v900, 0.5
        %v905 = vmul.f32 %v901, 0.5
        %v906 = vmul.f32 %v902, 0.5
        %v907 = vmul.f32 %v903, %v899
        %v908 = vmul.f32 %v904, %v900
        %v909 = vmul.f32 %v905, %v901
        %v910 = vmul.f32 %v906, %v902
        %v911 = vsub.f32 %v891, 1.0
        %v912 = vsub.f32 %v892, 1.0
        %v913 = vsub.f32 %v893, 1.0
        %v914 = vsub.f32 %v894, 1.0
        %v915 = vmax.f32 %v911, 0.0
        %v916 = vmax.f32 %v912, 0.0
        %v917 = vmax.f32 %v913, 0.0
        %v918 = vmax.f32 %v914, 0.0
        %v919 = vadd.f32 %v907, %v915
        %v920 = vadd.f32 %v908, %v916
        %v921 = vadd.f32 %v909, %v917
        %v922 = vadd.f32 %v910, %v918
        %923 = vxpose.xlu0.b32.start [1/16] %v289, 128
        %924 = vxpose.xlu0.b32.cont [2/16] %v290, 128
        %925 = vxpose.xlu0.b32.cont [3/16] 0.0, 128
        %926 = vxpose.xlu0.b32.cont [4/16] 0.0, 128
        %927 = vxpose.xlu0.b32.cont [5/16] 0.0, 128
        %928 = vxpose.xlu0.b32.cont [6/16] 0.0, 128
        %929 = vxpose.xlu0.b32.cont [7/16] 0.0, 128
        %930 = vxpose.xlu0.b32.cont [8/16] 0.0, 128
        %931 = vxpose.xlu0.b32.cont [9/16] 0.0, 128
        %932 = vxpose.xlu0.b32.cont [10/16] 0.0, 128
        %933 = vxpose.xlu0.b32.cont [11/16] 0.0, 128
        %934 = vxpose.xlu0.b32.cont [12/16] 0.0, 128
        %935 = vxpose.xlu0.b32.cont [13/16] 0.0, 128
        %936 = vxpose.xlu0.b32.cont [14/16] 0.0, 128
        %937 = vxpose.xlu0.b32.cont [15/16] 0.0, 128
        %938 = vxpose.xlu0.b32.end [16/16] 0.0, 128
        %v939 = vpop.trf.xlu0
        %v940 = vpop.trf.xlu0
        %v941 = vpop.trf.xlu0
        %v942 = vpop.trf.xlu0
        %v943 = vpop.trf.xlu0
        %v944 = vpop.trf.xlu0
        %v945 = vpop.trf.xlu0
        %v946 = vpop.trf.xlu0
        %v947 = vpop.trf.xlu0
        %v948 = vpop.trf.xlu0
        %v949 = vpop.trf.xlu0
        %v950 = vpop.trf.xlu0
        %v951 = vpop.trf.xlu0
        %v952 = vpop.trf.xlu0
        %v953 = vpop.trf.xlu0
        %v954 = vpop.trf.xlu0
        %v956 = vsel %vm541, %v939, 0
        %v959 = vsel %vm541, %v940, 0
        %v962 = vsel %vm541, %v941, 0
        %v965 = vsel %vm541, %v942, 0
        %967 = vmatprep.subr.mxu0 %v920
        %968 = vmatpush1.msra.mxu0 %v919
        %969 = vmatprep.subr.mxu0 %v922
        %970 = vmatpush1.msra.mxu0 %v921
        %971 = vmatprep.subr.mxu0 0.0
        %972 = vmatpush1.msra.mxu0 0.0
        %973 = vmatprep.subr.mxu0 0.0
        %974 = vmatpush1.msra.mxu0 0.0
        %975 = vmatprep.subr.mxu0 0.0
        %976 = vmatpush1.msra.mxu0 0.0
        %977 = vmatprep.subr.mxu0 0.0
        %978 = vmatpush1.msra.mxu0 0.0
        %979 = vmatprep.subr.mxu0 0.0
        %980 = vmatpush1.msra.mxu0 0.0
        %981 = vmatprep.subr.mxu0 0.0
        %982 = vmatpush1.msra.mxu0 0.0
        %983 = vmatprep.subr.mxu0 0.0
        %984 = vmatpush1.msra.mxu0 0.0
        %985 = vmatprep.subr.mxu0 0.0
        %986 = vmatpush1.msra.mxu0 0.0
        %987 = vmatprep.subr.mxu0 0.0
        %988 = vmatpush1.msra.mxu0 0.0
        %989 = vmatprep.subr.mxu0 0.0
        %990 = vmatpush1.msra.mxu0 0.0
        %991 = vmatprep.subr.mxu0 0.0
        %992 = vmatpush1.msra.mxu0 0.0
        %993 = vmatprep.subr.mxu0 0.0
        %994 = vmatpush1.msra.mxu0 0.0
        %995 = vmatprep.subr.mxu0 0.0
        %996 = vmatpush1.msra.mxu0 0.0
        %997 = vmatprep.subr.mxu0 0.0
        %998 = vmatpush1.msra.mxu0 0.0
        %999 = vmatprep.subr.mxu0 0.0
        %1000 = vmatpush1.msra.mxu0 0.0
        %1001 = vmatprep.subr.mxu0 0.0
        %1002 = vmatpush1.msra.mxu0 0.0
        %1003 = vmatprep.subr.mxu0 0.0
        %1004 = vmatpush1.msra.mxu0 0.0
        %1005 = vmatprep.subr.mxu0 0.0
        %1006 = vmatpush1.msra.mxu0 0.0
        %1007 = vmatprep.subr.mxu0 0.0
        %1008 = vmatpush1.msra.mxu0 0.0
        %1009 = vmatprep.subr.mxu0 0.0
        %1010 = vmatpush1.msra.mxu0 0.0
        %1011 = vmatprep.subr.mxu0 0.0
        %1012 = vmatpush1.msra.mxu0 0.0
        %1013 = vmatprep.subr.mxu0 0.0
        %1014 = vmatpush1.msra.mxu0 0.0
        %1015 = vmatprep.subr.mxu0 0.0
        %1016 = vmatpush1.msra.mxu0 0.0
        %1017 = vmatprep.subr.mxu0 0.0
        %1018 = vmatpush1.msra.mxu0 0.0
        %1019 = vmatprep.subr.mxu0 0.0
        %1020 = vmatpush1.msra.mxu0 0.0
        %1021 = vmatprep.subr.mxu0 0.0
        %1022 = vmatpush1.msra.mxu0 0.0
        %1023 = vmatprep.subr.mxu0 0.0
        %1024 = vmatpush1.msra.mxu0 0.0
        %1025 = vmatprep.subr.mxu0 0.0
        %1026 = vmatpush1.msra.mxu0 0.0
        %1027 = vmatprep.subr.mxu0 0.0
        %1028 = vmatpush1.msra.mxu0 0.0
        %1029 = vmatprep.subr.mxu0 0.0
        %1030 = vmatpush1.msra.mxu0 0.0
        %1031 = vmatprep.mubr.f32.mxu0 0.0
        %1032 = vmatmul.mubr.f32.gmra.mrb[0].mxu0 %v956
        %v1033 = vpop.f32.mrb[0].mxu0
        %v1034 = vadd.f32 0.0, %v1033
        %v1035 = vpop.f32.mrb[0].mxu0
        %v1036 = vadd.f32 0.0, %v1035
        %1037 = vmatprep.mubr.f32.mxu0 0.0
        %1038 = vmatmul.mubr.f32.gmra.mrb[0].mxu0 %v959
        %v1039 = vpop.f32.mrb[0].mxu0
        %v1040 = vadd.f32 0.0, %v1039
        %v1041 = vpop.f32.mrb[0].mxu0
        %v1042 = vadd.f32 0.0, %v1041
        %1043 = vmatprep.mubr.f32.mxu0 0.0
        %1044 = vmatmul.mubr.f32.gmra.mrb[0].mxu0 %v962
        %v1045 = vpop.f32.mrb[0].mxu0
        %v1046 = vadd.f32 0.0, %v1045
        %v1047 = vpop.f32.mrb[0].mxu0
        %v1048 = vadd.f32 0.0, %v1047
        %1049 = vmatprep.mubr.f32.mxu0 0.0
        %1050 = vmatmul.mubr.f32.gmra.mrb[0].mxu0 %v965
        %v1051 = vpop.f32.mrb[0].mxu0
        %v1052 = vadd.f32 0.0, %v1051
        %v1053 = vpop.f32.mrb[0].mxu0
        %v1054 = vadd.f32 0.0, %v1053
        %1055 = vdwg.mxu0
        %v1056 = vmul.f32 %v1034, 1.4142135
        %v1057 = vmul.f32 %v1036, 1.4142135
        %v1058 = vmul.f32 %v1040, 1.4142135
        %v1059 = vmul.f32 %v1042, 1.4142135
        %v1060 = vmul.f32 %v1046, 1.4142135
        %v1061 = vmul.f32 %v1048, 1.4142135
        %v1062 = vmul.f32 %v1052, 1.4142135
        %v1063 = vmul.f32 %v1054, 1.4142135
        %v1064 = vsub.f32 %v1056, %v537
        %v1065 = vsub.f32 %v1057, %v538
        %v1066 = vsub.f32 %v1058, %v539
        %v1067 = vsub.f32 %v1059, %v540
        %v1068 = vsub.f32 %v790, %v1060
        %v1069 = vsub.f32 %v791, %v1061
        %v1070 = vsub.f32 %v792, %v1062
        %v1071 = vsub.f32 %v793, %v1063
        %1072 = vxpose.xlu0.b32.start [1/16] %v1068, 128
        %1073 = vxpose.xlu0.b32.cont [2/16] %v1070, 128
        %1074 = vxpose.xlu0.b32.cont [3/16] %v1064, 128
        %1075 = vxpose.xlu0.b32.cont [4/16] %v1066, 128
        %1076 = vxpose.xlu0.b32.cont [5/16] 0.0, 128
        %1077 = vxpose.xlu0.b32.cont [6/16] 0.0, 128
        %1078 = vxpose.xlu0.b32.cont [7/16] 0.0, 128
        %1079 = vxpose.xlu0.b32.cont [8/16] 0.0, 128
        %1080 = vxpose.xlu0.b32.cont [9/16] 0.0, 128
        %1081 = vxpose.xlu0.b32.cont [10/16] 0.0, 128
        %1082 = vxpose.xlu0.b32.cont [11/16] 0.0, 128
        %1083 = vxpose.xlu0.b32.cont [12/16] 0.0, 128
        %1084 = vxpose.xlu0.b32.cont [13/16] 0.0, 128
        %1085 = vxpose.xlu0.b32.cont [14/16] 0.0, 128
        %1086 = vxpose.xlu0.b32.cont [15/16] 0.0, 128
        %1087 = vxpose.xlu0.b32.end [16/16] 0.0, 128
        %v1088 = vpop.trf.xlu0
        %v1089 = vpop.trf.xlu0
        %v1090 = vpop.trf.xlu0
        %v1091 = vpop.trf.xlu0
        %v1092 = vpop.trf.xlu0
        %v1093 = vpop.trf.xlu0
        %v1094 = vpop.trf.xlu0
        %v1095 = vpop.trf.xlu0
        %v1096 = vpop.trf.xlu0
        %v1097 = vpop.trf.xlu0
        %v1098 = vpop.trf.xlu0
        %v1099 = vpop.trf.xlu0
        %v1100 = vpop.trf.xlu0
        %v1101 = vpop.trf.xlu0
        %v1102 = vpop.trf.xlu0
        %v1103 = vpop.trf.xlu0
        %1104 = vxpose.xlu0.b32.start [1/16] %v1069, 128
        %1105 = vxpose.xlu0.b32.cont [2/16] %v1071, 128
        %1106 = vxpose.xlu0.b32.cont [3/16] %v1065, 128
        %1107 = vxpose.xlu0.b32.cont [4/16] %v1067, 128
        %1108 = vxpose.xlu0.b32.cont [5/16] 0.0, 128
        %1109 = vxpose.xlu0.b32.cont [6/16] 0.0, 128
        %1110 = vxpose.xlu0.b32.cont [7/16] 0.0, 128
        %1111 = vxpose.xlu0.b32.cont [8/16] 0.0, 128
        %1112 = vxpose.xlu0.b32.cont [9/16] 0.0, 128
        %1113 = vxpose.xlu0.b32.cont [10/16] 0.0, 128
        %1114 = vxpose.xlu0.b32.cont [11/16] 0.0, 128
        %1115 = vxpose.xlu0.b32.cont [12/16] 0.0, 128
        %1116 = vxpose.xlu0.b32.cont [13/16] 0.0, 128
        %1117 = vxpose.xlu0.b32.cont [14/16] 0.0, 128
        %1118 = vxpose.xlu0.b32.cont [15/16] 0.0, 128
        %1119 = vxpose.xlu0.b32.end [16/16] 0.0, 128
        %v1120 = vpop.trf.xlu0
        %v1121 = vpop.trf.xlu0
        %v1122 = vpop.trf.xlu0
        %v1123 = vpop.trf.xlu0
        %v1124 = vpop.trf.xlu0
        %v1125 = vpop.trf.xlu0
        %v1126 = vpop.trf.xlu0
        %v1127 = vpop.trf.xlu0
        %v1128 = vpop.trf.xlu0
        %v1129 = vpop.trf.xlu0
        %v1130 = vpop.trf.xlu0
        %v1131 = vpop.trf.xlu0
        %v1132 = vpop.trf.xlu0
        %v1133 = vpop.trf.xlu0
        %v1134 = vpop.trf.xlu0
        %v1135 = vpop.trf.xlu0
        %v1137 = vsel %vm335, %v1088, 0
        %v1140 = vsel %vm335, %v1089, 0
        %v1143 = vsel %vm335, %v1090, 0
        %v1146 = vsel %vm335, %v1091, 0
        %v1149 = vsel %vm335, %v1092, 0
        %v1152 = vsel %vm335, %v1093, 0
        %v1155 = vsel %vm335, %v1094, 0
        %v1158 = vsel %vm335, %v1095, 0
        %v1161 = vsel %vm335, %v1096, 0
        %v1164 = vsel %vm335, %v1097, 0
        %v1167 = vsel %vm335, %v1098, 0
        %v1170 = vsel %vm335, %v1099, 0
        %v1173 = vsel %vm335, %v1100, 0
        %v1176 = vsel %vm335, %v1101, 0
        %v1179 = vsel %vm335, %v1102, 0
        %v1182 = vsel %vm335, %v1103, 0
        %v1185 = vsel %vm335, %v1120, 0
        %v1188 = vsel %vm335, %v1121, 0
        %v1191 = vsel %vm335, %v1122, 0
        %v1194 = vsel %vm335, %v1123, 0
        %v1197 = vsel %vm335, %v1124, 0
        %v1200 = vsel %vm335, %v1125, 0
        %v1203 = vsel %vm335, %v1126, 0
        %v1206 = vsel %vm335, %v1127, 0
        %v1209 = vsel %vm335, %v1128, 0
        %v1212 = vsel %vm335, %v1129, 0
        %v1215 = vsel %vm335, %v1130, 0
        %v1218 = vsel %vm335, %v1131, 0
        %v1221 = vsel %vm335, %v1132, 0
        %v1224 = vsel %vm335, %v1133, 0
        %v1227 = vsel %vm335, %v1134, 0
        %v1230 = vsel %vm335, %v1135, 0
        %1232 = vmatprep.subr.mxu0 0.0
        %1233 = vmatpush1.msra.mxu0 %v282
        %1234 = vmatprep.subr.mxu0 0.0
        %1235 = vmatpush1.msra.mxu0 %v283
        %1236 = vmatprep.subr.mxu0 0.0
        %1237 = vmatpush1.msra.mxu0 %v284
        %1238 = vmatprep.subr.mxu0 0.0
        %1239 = vmatpush1.msra.mxu0 %v285
        %1240 = vmatprep.subr.mxu0 0.0
        %1241 = vmatpush1.msra.mxu0 0.0
        %1242 = vmatprep.subr.mxu0 0.0
        %1243 = vmatpush1.msra.mxu0 0.0
        %1244 = vmatprep.subr.mxu0 0.0
        %1245 = vmatpush1.msra.mxu0 0.0
        %1246 = vmatprep.subr.mxu0 0.0
        %1247 = vmatpush1.msra.mxu0 0.0
        %1248 = vmatprep.subr.mxu0 0.0
        %1249 = vmatpush1.msra.mxu0 0.0
        %1250 = vmatprep.subr.mxu0 0.0
        %1251 = vmatpush1.msra.mxu0 0.0
        %1252 = vmatprep.subr.mxu0 0.0
        %1253 = vmatpush1.msra.mxu0 0.0
        %1254 = vmatprep.subr.mxu0 0.0
        %1255 = vmatpush1.msra.mxu0 0.0
        %1256 = vmatprep.subr.mxu0 0.0
        %1257 = vmatpush1.msra.mxu0 0.0
        %1258 = vmatprep.subr.mxu0 0.0
        %1259 = vmatpush1.msra.mxu0 0.0
        %1260 = vmatprep.subr.mxu0 0.0
        %1261 = vmatpush1.msra.mxu0 0.0
        %1262 = vmatprep.subr.mxu0 0.0
        %1263 = vmatpush1.msra.mxu0 0.0
        %1264 = vmatprep.subr.mxu0 0.0
        %1265 = vmatpush1.msra.mxu0 0.0
        %1266 = vmatprep.subr.mxu0 0.0
        %1267 = vmatpush1.msra.mxu0 0.0
        %1268 = vmatprep.subr.mxu0 0.0
        %1269 = vmatpush1.msra.mxu0 0.0
        %1270 = vmatprep.subr.mxu0 0.0
        %1271 = vmatpush1.msra.mxu0 0.0
        %1272 = vmatprep.subr.mxu0 0.0
        %1273 = vmatpush1.msra.mxu0 0.0
        %1274 = vmatprep.subr.mxu0 0.0
        %1275 = vmatpush1.msra.mxu0 0.0
        %1276 = vmatprep.subr.mxu0 0.0
        %1277 = vmatpush1.msra.mxu0 0.0
        %1278 = vmatprep.subr.mxu0 0.0
        %1279 = vmatpush1.msra.mxu0 0.0
        %1280 = vmatprep.subr.mxu0 0.0
        %1281 = vmatpush1.msra.mxu0 0.0
        %1282 = vmatprep.subr.mxu0 0.0
        %1283 = vmatpush1.msra.mxu0 0.0
        %1284 = vmatprep.subr.mxu0 0.0
        %1285 = vmatpush1.msra.mxu0 0.0
        %1286 = vmatprep.subr.mxu0 0.0
        %1287 = vmatpush1.msra.mxu0 0.0
        %1288 = vmatprep.subr.mxu0 0.0
        %1289 = vmatpush1.msra.mxu0 0.0
        %1290 = vmatprep.subr.mxu0 0.0
        %1291 = vmatpush1.msra.mxu0 0.0
        %1292 = vmatprep.subr.mxu0 0.0
        %1293 = vmatpush1.msra.mxu0 0.0
        %1294 = vmatprep.subr.mxu0 0.0
        %1295 = vmatpush1.msra.mxu0 0.0
        %1296 = vmatprep.mubr.f32.mxu0 0.0
        %1297 = vmatmul.mubr.f32.gmra.mrb[0].mxu0 %v1137
        %v1298 = vpop.f32.mrb[0].mxu0
        %v1299 = vadd.f32 0.0, %v1298
        %v1300 = vpop.f32.mrb[0].mxu0
        %1301 = vmatprep.mubr.f32.mxu0 0.0
        %1302 = vmatmul.mubr.f32.gmra.mrb[0].mxu0 %v1140
        %v1303 = vpop.f32.mrb[0].mxu0
        %v1304 = vadd.f32 0.0, %v1303
        %v1305 = vpop.f32.mrb[0].mxu0
        %1306 = vmatprep.mubr.f32.mxu0 0.0
        %1307 = vmatmul.mubr.f32.gmra.mrb[0].mxu0 %v1143
        %v1308 = vpop.f32.mrb[0].mxu0
        %v1309 = vadd.f32 0.0, %v1308
        %v1310 = vpop.f32.mrb[0].mxu0
        %1311 = vmatprep.mubr.f32.mxu0 0.0
        %1312 = vmatmul.mubr.f32.gmra.mrb[0].mxu0 %v1146
        %v1313 = vpop.f32.mrb[0].mxu0
        %v1314 = vadd.f32 0.0, %v1313
        %v1315 = vpop.f32.mrb[0].mxu0
        %1316 = vmatprep.mubr.f32.mxu0 0.0
        %1317 = vmatmul.mubr.f32.gmra.mrb[0].mxu0 %v1149
        %v1318 = vpop.f32.mrb[0].mxu0
        %v1319 = vadd.f32 0.0, %v1318
        %v1320 = vpop.f32.mrb[0].mxu0
        %1321 = vmatprep.mubr.f32.mxu0 0.0
        %1322 = vmatmul.mubr.f32.gmra.mrb[0].mxu0 %v1152
        %v1323 = vpop.f32.mrb[0].mxu0
        %v1324 = vadd.f32 0.0, %v1323
        %v1325 = vpop.f32.mrb[0].mxu0
        %1326 = vmatprep.mubr.f32.mxu0 0.0
        %1327 = vmatmul.mubr.f32.gmra.mrb[0].mxu0 %v1155
        %v1328 = vpop.f32.mrb[0].mxu0
        %v1329 = vadd.f32 0.0, %v1328
        %v1330 = vpop.f32.mrb[0].mxu0
        %1331 = vmatprep.mubr.f32.mxu0 0.0
        %1332 = vmatmul.mubr.f32.gmra.mrb[0].mxu0 %v1158
        %v1333 = vpop.f32.mrb[0].mxu0
        %v1334 = vadd.f32 0.0, %v1333
        %v1335 = vpop.f32.mrb[0].mxu0
        %1336 = vmatprep.mubr.f32.mxu0 0.0
        %1337 = vmatmul.mubr.f32.gmra.mrb[0].mxu0 %v1161
        %v1338 = vpop.f32.mrb[0].mxu0
        %v1339 = vadd.f32 0.0, %v1338
        %v1340 = vpop.f32.mrb[0].mxu0
        %1341 = vmatprep.mubr.f32.mxu0 0.0
        %1342 = vmatmul.mubr.f32.gmra.mrb[0].mxu0 %v1164
        %v1343 = vpop.f32.mrb[0].mxu0
        %v1344 = vadd.f32 0.0, %v1343
        %v1345 = vpop.f32.mrb[0].mxu0
        %1346 = vmatprep.mubr.f32.mxu0 0.0
        %1347 = vmatmul.mubr.f32.gmra.mrb[0].mxu0 %v1167
        %v1348 = vpop.f32.mrb[0].mxu0
        %v1349 = vadd.f32 0.0, %v1348
        %v1350 = vpop.f32.mrb[0].mxu0
        %1351 = vmatprep.mubr.f32.mxu0 0.0
        %1352 = vmatmul.mubr.f32.gmra.mrb[0].mxu0 %v1170
        %v1353 = vpop.f32.mrb[0].mxu0
        %v1354 = vadd.f32 0.0, %v1353
        %v1355 = vpop.f32.mrb[0].mxu0
        %1356 = vmatprep.mubr.f32.mxu0 0.0
        %1357 = vmatmul.mubr.f32.gmra.mrb[0].mxu0 %v1173
        %v1358 = vpop.f32.mrb[0].mxu0
        %v1359 = vadd.f32 0.0, %v1358
        %v1360 = vpop.f32.mrb[0].mxu0
        %1361 = vmatprep.mubr.f32.mxu0 0.0
        %1362 = vmatmul.mubr.f32.gmra.mrb[0].mxu0 %v1176
        %v1363 = vpop.f32.mrb[0].mxu0
        %v1364 = vadd.f32 0.0, %v1363
        %v1365 = vpop.f32.mrb[0].mxu0
        %1366 = vmatprep.mubr.f32.mxu0 0.0
        %1367 = vmatmul.mubr.f32.gmra.mrb[0].mxu0 %v1179
        %v1368 = vpop.f32.mrb[0].mxu0
        %v1369 = vadd.f32 0.0, %v1368
        %v1370 = vpop.f32.mrb[0].mxu0
        %1371 = vmatprep.mubr.f32.mxu0 0.0
        %1372 = vmatmul.mubr.f32.gmra.mrb[0].mxu0 %v1182
        %v1373 = vpop.f32.mrb[0].mxu0
        %v1374 = vadd.f32 0.0, %v1373
        %v1375 = vpop.f32.mrb[0].mxu0
        %1376 = vmatprep.mubr.f32.mxu0 0.0
        %1377 = vmatmul.mubr.f32.gmra.mrb[0].mxu0 %v1185
        %v1378 = vpop.f32.mrb[0].mxu0
        %v1379 = vadd.f32 0.0, %v1378
        %v1380 = vpop.f32.mrb[0].mxu0
        %1381 = vmatprep.mubr.f32.mxu0 0.0
        %1382 = vmatmul.mubr.f32.gmra.mrb[0].mxu0 %v1188
        %v1383 = vpop.f32.mrb[0].mxu0
        %v1384 = vadd.f32 0.0, %v1383
        %v1385 = vpop.f32.mrb[0].mxu0
        %1386 = vmatprep.mubr.f32.mxu0 0.0
        %1387 = vmatmul.mubr.f32.gmra.mrb[0].mxu0 %v1191
        %v1388 = vpop.f32.mrb[0].mxu0
        %v1389 = vadd.f32 0.0, %v1388
        %v1390 = vpop.f32.mrb[0].mxu0
        %1391 = vmatprep.mubr.f32.mxu0 0.0
        %1392 = vmatmul.mubr.f32.gmra.mrb[0].mxu0 %v1194
        %v1393 = vpop.f32.mrb[0].mxu0
        %v1394 = vadd.f32 0.0, %v1393
        %v1395 = vpop.f32.mrb[0].mxu0
        %1396 = vmatprep.mubr.f32.mxu0 0.0
        %1397 = vmatmul.mubr.f32.gmra.mrb[0].mxu0 %v1197
        %v1398 = vpop.f32.mrb[0].mxu0
        %v1399 = vadd.f32 0.0, %v1398
        %v1400 = vpop.f32.mrb[0].mxu0
        %1401 = vmatprep.mubr.f32.mxu0 0.0
        %1402 = vmatmul.mubr.f32.gmra.mrb[0].mxu0 %v1200
        %v1403 = vpop.f32.mrb[0].mxu0
        %v1404 = vadd.f32 0.0, %v1403
        %v1405 = vpop.f32.mrb[0].mxu0
        %1406 = vmatprep.mubr.f32.mxu0 0.0
        %1407 = vmatmul.mubr.f32.gmra.mrb[0].mxu0 %v1203
        %v1408 = vpop.f32.mrb[0].mxu0
        %v1409 = vadd.f32 0.0, %v1408
        %v1410 = vpop.f32.mrb[0].mxu0
        %1411 = vmatprep.mubr.f32.mxu0 0.0
        %1412 = vmatmul.mubr.f32.gmra.mrb[0].mxu0 %v1206
        %v1413 = vpop.f32.mrb[0].mxu0
        %v1414 = vadd.f32 0.0, %v1413
        %v1415 = vpop.f32.mrb[0].mxu0
        %1416 = vmatprep.mubr.f32.mxu0 0.0
        %1417 = vmatmul.mubr.f32.gmra.mrb[0].mxu0 %v1209
        %v1418 = vpop.f32.mrb[0].mxu0
        %v1419 = vadd.f32 0.0, %v1418
        %v1420 = vpop.f32.mrb[0].mxu0
        %1421 = vmatprep.mubr.f32.mxu0 0.0
        %1422 = vmatmul.mubr.f32.gmra.mrb[0].mxu0 %v1212
        %v1423 = vpop.f32.mrb[0].mxu0
        %v1424 = vadd.f32 0.0, %v1423
        %v1425 = vpop.f32.mrb[0].mxu0
        %1426 = vmatprep.mubr.f32.mxu0 0.0
        %1427 = vmatmul.mubr.f32.gmra.mrb[0].mxu0 %v1215
        %v1428 = vpop.f32.mrb[0].mxu0
        %v1429 = vadd.f32 0.0, %v1428
        %v1430 = vpop.f32.mrb[0].mxu0
        %1431 = vmatprep.mubr.f32.mxu0 0.0
        %1432 = vmatmul.mubr.f32.gmra.mrb[0].mxu0 %v1218
        %v1433 = vpop.f32.mrb[0].mxu0
        %v1434 = vadd.f32 0.0, %v1433
        %v1435 = vpop.f32.mrb[0].mxu0
        %1436 = vmatprep.mubr.f32.mxu0 0.0
        %1437 = vmatmul.mubr.f32.gmra.mrb[0].mxu0 %v1221
        %v1438 = vpop.f32.mrb[0].mxu0
        %v1439 = vadd.f32 0.0, %v1438
        %v1440 = vpop.f32.mrb[0].mxu0
        %1441 = vmatprep.mubr.f32.mxu0 0.0
        %1442 = vmatmul.mubr.f32.gmra.mrb[0].mxu0 %v1224
        %v1443 = vpop.f32.mrb[0].mxu0
        %v1444 = vadd.f32 0.0, %v1443
        %v1445 = vpop.f32.mrb[0].mxu0
        %1446 = vmatprep.mubr.f32.mxu0 0.0
        %1447 = vmatmul.mubr.f32.gmra.mrb[0].mxu0 %v1227
        %v1448 = vpop.f32.mrb[0].mxu0
        %v1449 = vadd.f32 0.0, %v1448
        %v1450 = vpop.f32.mrb[0].mxu0
        %1451 = vmatprep.mubr.f32.mxu0 0.0
        %1452 = vmatmul.mubr.f32.gmra.mrb[0].mxu0 %v1230
        %v1453 = vpop.f32.mrb[0].mxu0
        %v1454 = vadd.f32 0.0, %v1453
        %v1455 = vpop.f32.mrb[0].mxu0
        %1456 = vdwg.mxu0
        %v1457 = vmul.f32 %v303, 10.1
        %v1458 = vmul.f32 %v304, 10.1
        %v1459 = vmul.f32 %v305, 10.1
        %v1460 = vmul.f32 %v306, 10.1
        %v1461 = vmul.f32 %v307, 10.1
        %v1462 = vmul.f32 %v308, 10.1
        %v1463 = vmul.f32 %v309, 10.1
        %v1464 = vmul.f32 %v310, 10.1
        %v1465 = vmul.f32 %v311, 10.1
        %v1466 = vmul.f32 %v312, 10.1
        %v1467 = vmul.f32 %v313, 10.1
        %v1468 = vmul.f32 %v314, 10.1
        %v1469 = vmul.f32 %v315, 10.1
        %v1470 = vmul.f32 %v316, 10.1
        %v1471 = vmul.f32 %v317, 10.1
        %v1472 = vmul.f32 %v318, 10.1
        %v1473 = vmul.f32 %v319, 10.1
        %v1474 = vmul.f32 %v320, 10.1
        %v1475 = vmul.f32 %v321, 10.1
        %v1476 = vmul.f32 %v322, 10.1
        %v1477 = vmul.f32 %v323, 10.1
        %v1478 = vmul.f32 %v324, 10.1
        %v1479 = vmul.f32 %v325, 10.1
        %v1480 = vmul.f32 %v326, 10.1
        %v1481 = vmul.f32 %v327, 10.1
        %v1482 = vmul.f32 %v328, 10.1
        %v1483 = vmul.f32 %v329, 10.1
        %v1484 = vmul.f32 %v330, 10.1
        %v1485 = vmul.f32 %v331, 10.1
        %v1486 = vmul.f32 %v332, 10.1
        %v1487 = vmul.f32 %v333, 10.1
        %v1488 = vmul.f32 %v334, 10.1
        %v1489 = vmul.f32 %v1299, 3.1464264
        %v1490 = vmul.f32 %v1304, 3.1464264
        %v1491 = vmul.f32 %v1309, 3.1464264
        %v1492 = vmul.f32 %v1314, 3.1464264
        %v1493 = vmul.f32 %v1319, 3.1464264
        %v1494 = vmul.f32 %v1324, 3.1464264
        %v1495 = vmul.f32 %v1329, 3.1464264
        %v1496 = vmul.f32 %v1334, 3.1464264
        %v1497 = vmul.f32 %v1339, 3.1464264
        %v1498 = vmul.f32 %v1344, 3.1464264
        %v1499 = vmul.f32 %v1349, 3.1464264
        %v1500 = vmul.f32 %v1354, 3.1464264
        %v1501 = vmul.f32 %v1359, 3.1464264
        %v1502 = vmul.f32 %v1364, 3.1464264
        %v1503 = vmul.f32 %v1369, 3.1464264
        %v1504 = vmul.f32 %v1374, 3.1464264
        %v1505 = vmul.f32 %v1379, 3.1464264
        %v1506 = vmul.f32 %v1384, 3.1464264
        %v1507 = vmul.f32 %v1389, 3.1464264
        %v1508 = vmul.f32 %v1394, 3.1464264
        %v1509 = vmul.f32 %v1399, 3.1464264
        %v1510 = vmul.f32 %v1404, 3.1464264
        %v1511 = vmul.f32 %v1409, 3.1464264
        %v1512 = vmul.f32 %v1414, 3.1464264
        %v1513 = vmul.f32 %v1419, 3.1464264
        %v1514 = vmul.f32 %v1424, 3.1464264
        %v1515 = vmul.f32 %v1429, 3.1464264
        %v1516 = vmul.f32 %v1434, 3.1464264
        %v1517 = vmul.f32 %v1439, 3.1464264
        %v1518 = vmul.f32 %v1444, 3.1464264
        %v1519 = vmul.f32 %v1449, 3.1464264
        %v1520 = vmul.f32 %v1454, 3.1464264
        %v1521 = vadd.f32 %v1457, %v1489
        %v1522 = vadd.f32 %v1458, %v1490
        %v1523 = vadd.f32 %v1459, %v1491
        %v1524 = vadd.f32 %v1460, %v1492
        %v1525 = vadd.f32 %v1461, %v1493
        %v1526 = vadd.f32 %v1462, %v1494
        %v1527 = vadd.f32 %v1463, %v1495
        %v1528 = vadd.f32 %v1464, %v1496
        %v1529 = vadd.f32 %v1465, %v1497
        %v1530 = vadd.f32 %v1466, %v1498
        %v1531 = vadd.f32 %v1467, %v1499
        %v1532 = vadd.f32 %v1468, %v1500
        %v1533 = vadd.f32 %v1469, %v1501
        %v1534 = vadd.f32 %v1470, %v1502
        %v1535 = vadd.f32 %v1471, %v1503
        %v1536 = vadd.f32 %v1472, %v1504
        %v1537 = vadd.f32 %v1473, %v1505
        %v1538 = vadd.f32 %v1474, %v1506
        %v1539 = vadd.f32 %v1475, %v1507
        %v1540 = vadd.f32 %v1476, %v1508
        %v1541 = vadd.f32 %v1477, %v1509
        %v1542 = vadd.f32 %v1478, %v1510
        %v1543 = vadd.f32 %v1479, %v1511
        %v1544 = vadd.f32 %v1480, %v1512
        %v1545 = vadd.f32 %v1481, %v1513
        %v1546 = vadd.f32 %v1482, %v1514
        %v1547 = vadd.f32 %v1483, %v1515
        %v1548 = vadd.f32 %v1484, %v1516
        %v1549 = vadd.f32 %v1485, %v1517
        %v1550 = vadd.f32 %v1486, %v1518
        %v1551 = vadd.f32 %v1487, %v1519
        %v1552 = vadd.f32 %v1488, %v1520
        %v1553 = vmul.f32 %v1521, 0.5
        %v1554 = vmul.f32 %v1522, 0.5
        %v1555 = vmul.f32 %v1523, 0.5
        %v1556 = vmul.f32 %v1524, 0.5
        %v1557 = vmul.f32 %v1525, 0.5
        %v1558 = vmul.f32 %v1526, 0.5
        %v1559 = vmul.f32 %v1527, 0.5
        %v1560 = vmul.f32 %v1528, 0.5
        %v1561 = vmul.f32 %v1529, 0.5
        %v1562 = vmul.f32 %v1530, 0.5
        %v1563 = vmul.f32 %v1531, 0.5
        %v1564 = vmul.f32 %v1532, 0.5
        %v1565 = vmul.f32 %v1533, 0.5
        %v1566 = vmul.f32 %v1534, 0.5
        %v1567 = vmul.f32 %v1535, 0.5
        %v1568 = vmul.f32 %v1536, 0.5
        %v1569 = vmul.f32 %v1537, 0.5
        %v1570 = vmul.f32 %v1538, 0.5
        %v1571 = vmul.f32 %v1539, 0.5
        %v1572 = vmul.f32 %v1540, 0.5
        %v1573 = vmul.f32 %v1541, 0.5
        %v1574 = vmul.f32 %v1542, 0.5
        %v1575 = vmul.f32 %v1543, 0.5
        %v1576 = vmul.f32 %v1544, 0.5
        %v1577 = vmul.f32 %v1545, 0.5
        %v1578 = vmul.f32 %v1546, 0.5
        %v1579 = vmul.f32 %v1547, 0.5
        %v1580 = vmul.f32 %v1548, 0.5
        %v1581 = vmul.f32 %v1549, 0.5
        %v1582 = vmul.f32 %v1550, 0.5
        %v1583 = vmul.f32 %v1551, 0.5
        %v1584 = vmul.f32 %v1552, 0.5
        %v1586 = vlaneseq
        %v1587 = vshrl.u32 %v1586, 7
        %v1588 = vsub.s32 0, %v1587
        %v1589 = vrot.slane %v286, %v1588
        %v1591 = vadd.f32 %v1553, %v1589
        %v1592 = vadd.f32 %v1554, %v1589
        %v1593 = vadd.f32 %v1555, %v1589
        %v1594 = vadd.f32 %v1556, %v1589
        %v1595 = vadd.f32 %v1557, %v1589
        %v1596 = vadd.f32 %v1558, %v1589
        %v1597 = vadd.f32 %v1559, %v1589
        %v1598 = vadd.f32 %v1560, %v1589
        %v1599 = vadd.f32 %v1561, %v1589
        %v1600 = vadd.f32 %v1562, %v1589
        %v1601 = vadd.f32 %v1563, %v1589
        %v1602 = vadd.f32 %v1564, %v1589
        %v1603 = vadd.f32 %v1565, %v1589
        %v1604 = vadd.f32 %v1566, %v1589
        %v1605 = vadd.f32 %v1567, %v1589
        %v1606 = vadd.f32 %v1568, %v1589
        %v1607 = vadd.f32 %v1569, %v1589
        %v1608 = vadd.f32 %v1570, %v1589
        %v1609 = vadd.f32 %v1571, %v1589
        %v1610 = vadd.f32 %v1572, %v1589
        %v1611 = vadd.f32 %v1573, %v1589
        %v1612 = vadd.f32 %v1574, %v1589
        %v1613 = vadd.f32 %v1575, %v1589
        %v1614 = vadd.f32 %v1576, %v1589
        %v1615 = vadd.f32 %v1577, %v1589
        %v1616 = vadd.f32 %v1578, %v1589
        %v1617 = vadd.f32 %v1579, %v1589
        %v1618 = vadd.f32 %v1580, %v1589
        %v1619 = vadd.f32 %v1581, %v1589
        %v1620 = vadd.f32 %v1582, %v1589
        %v1621 = vadd.f32 %v1583, %v1589
        %v1622 = vadd.f32 %v1584, %v1589
        %s1623 = scalar_lea.vmem %s280, %s301
        %1624 = vst.msk [vmem:[%s1623] sm:$0xff] %vm335, %v1591
        %1625 = vst.msk [vmem:[%s1623 + $0x8] sm:$0xff] %vm335, %v1592
        %1626 = vst.msk [vmem:[%s1623 + $0x10] sm:$0xff] %vm335, %v1593
        %1627 = vst.msk [vmem:[%s1623 + $0x18] sm:$0xff] %vm335, %v1594
        %1628 = vst.msk [vmem:[%s1623 + $0x20] sm:$0xff] %vm335, %v1595
        %1629 = vst.msk [vmem:[%s1623 + $0x28] sm:$0xff] %vm335, %v1596
        %1630 = vst.msk [vmem:[%s1623 + $0x30] sm:$0xff] %vm335, %v1597
        %1631 = vst.msk [vmem:[%s1623 + $0x38] sm:$0xff] %vm335, %v1598
        %1632 = vst.msk [vmem:[%s1623 + $0x40] sm:$0xff] %vm335, %v1599
        %1633 = vst.msk [vmem:[%s1623 + $0x48] sm:$0xff] %vm335, %v1600
        %1634 = vst.msk [vmem:[%s1623 + $0x50] sm:$0xff] %vm335, %v1601
        %1635 = vst.msk [vmem:[%s1623 + $0x58] sm:$0xff] %vm335, %v1602
        %1636 = vst.msk [vmem:[%s1623 + $0x60] sm:$0xff] %vm335, %v1603
        %1637 = vst.msk [vmem:[%s1623 + $0x68] sm:$0xff] %vm335, %v1604
        %1638 = vst.msk [vmem:[%s1623 + $0x70] sm:$0xff] %vm335, %v1605
        %1639 = vst.msk [vmem:[%s1623 + $0x78] sm:$0xff] %vm335, %v1606
        %1640 = vst.msk [vmem:[%s1623 + $0x80] sm:$0xff] %vm335, %v1607
        %1641 = vst.msk [vmem:[%s1623 + $0x88] sm:$0xff] %vm335, %v1608
        %1642 = vst.msk [vmem:[%s1623 + $0x90] sm:$0xff] %vm335, %v1609
        %1643 = vst.msk [vmem:[%s1623 + $0x98] sm:$0xff] %vm335, %v1610
        %1644 = vst.msk [vmem:[%s1623 + $0xa0] sm:$0xff] %vm335, %v1611
        %1645 = vst.msk [vmem:[%s1623 + $0xa8] sm:$0xff] %vm335, %v1612
        %1646 = vst.msk [vmem:[%s1623 + $0xb0] sm:$0xff] %vm335, %v1613
        %1647 = vst.msk [vmem:[%s1623 + $0xb8] sm:$0xff] %vm335, %v1614
        %1648 = vst.msk [vmem:[%s1623 + $0xc0] sm:$0xff] %vm335, %v1615
        %1649 = vst.msk [vmem:[%s1623 + $0xc8] sm:$0xff] %vm335, %v1616
        %1650 = vst.msk [vmem:[%s1623 + $0xd0] sm:$0xff] %vm335, %v1617
        %1651 = vst.msk [vmem:[%s1623 + $0xd8] sm:$0xff] %vm335, %v1618
        %1652 = vst.msk [vmem:[%s1623 + $0xe0] sm:$0xff] %vm335, %v1619
        %1653 = vst.msk [vmem:[%s1623 + $0xe8] sm:$0xff] %vm335, %v1620
        %1654 = vst.msk [vmem:[%s1623 + $0xf0] sm:$0xff] %vm335, %v1621
        %1655 = vst.msk [vmem:[%s1623 + $0xf8] sm:$0xff] %vm335, %v1622
      $region53: #{tpu_custom_call.1} parent=47 // loop_footer
        %s300 = sadd.s32 1, %s296
      $region54: #{tpu_custom_call.1} parent=47 // loop_footer_branch
        %295 = sbr.rel target = $region50
      $region55: #{tpu_custom_call.1} parent=47 // loop_exit
        _
      %s1656 = smul.u32 64, %s18
      %p1657 = scmp.lt.s32.totalorder %s1656, 127
      %s1658 = scalar_select %p1657, %s1656, 127
      %s1659 = smul.addr %s1658, 8
      %s1660 = scalar_lea.vmem %s7, %s1659
      // Predicated region
      $region56: #{tpu_custom_call.1} parent=47 // pred_check
        %p1661 = pneg %p188
      $region57: #{tpu_custom_call.1} parent=47 // pred_check_branch
        %1663 = sbr.rel (%p1661) target = $region59
      $region58: #{tpu_custom_call.1} parent=47 // pred_region
        %s1664 = smul.u32 64, %s18
      $region59: #{tpu_custom_call.1} parent=47 // pred_fallthru
        _
    $region48: #{tpu_custom_call.1} parent=5 // pred_fallthru
      _
    %p1665 = scmp.le.s32.totalorder 2, %s13
    // Predicated region
    $region60: #{tpu_custom_call.1} parent=5 // pred_check
      %p1666 = pneg %p1665
    $region61: #{tpu_custom_call.1} parent=5 // pred_check_branch
      %1668 = sbr.rel (%p1666) target = $region63
    $region62: #{tpu_custom_call.1} parent=5 // pred_region
      %s1669 = ssub.s32 %s13, 2
      // Predicated region
      $region64: #{tpu_custom_call.1} parent=62 // pred_check
        %p1670 = pneg %p194
      $region65: #{tpu_custom_call.1} parent=62 // pred_check_branch
        %1672 = sbr.rel (%p1670) target = $region67
      $region66: #{tpu_custom_call.1} parent=62 // pred_region
        %s1673 = smul.u32 64, %s19
        %p1674 = scmp.lt.s32.totalorder %s1673, 127
        %s1675 = scalar_select %p1674, %s1673, 127
        %s1676 = smul.addr %s1675, 8
        %s1677 = scalar_lea.vmem %s7, %s1676
      $region67: #{tpu_custom_call.1} parent=62 // pred_fallthru
        _
    $region63: #{tpu_custom_call.1} parent=5 // pred_fallthru
      _
  $region6: #{tpu_custom_call.1} parent=0 // loop_footer
    %s17 = sadd.s32 1, %s13
  $region7: #{tpu_custom_call.1} parent=0 // loop_footer_branch
    %12 = sbr.rel target = $region3
  $region8: #{tpu_custom_call.1} parent=0 // loop_exit
    _

</llo_original>
